<compile_context>
chip_gen: v7x
topology: tpu7x:2x2x1
jax: 0.10.0
libtpu: 0.0.40
codegen_flags: <defaults>
</compile_context>

<pallas_src>
import jax
import jax.numpy as jnp
from jax.experimental import pallas as pl
from jax.experimental.pallas import tpu as pltpu


def _leaky_relu(x, neg_slope=0.2):
    return jnp.where(x > 0, x, neg_slope * x)


def encoder_kernel(x_ref, eps_ref,
                   w1_ref, b1_ref,
                   w2_ref, b2_ref,
                   bn_scale_ref, bn_shift_ref,
                   wmu_ref, bmu_ref,
                   wlv_ref, blv_ref,
                   z_ref):
    wdt = w1_ref.dtype
    x = x_ref[...].astype(wdt)

    # Layer 1: Linear(D_in -> 512) + LeakyReLU(0.2)   (f32 accumulation)
    h1 = jnp.dot(x, w1_ref[...], preferred_element_type=jnp.float32)
    h1 = _leaky_relu(h1 + b1_ref[...])

    # Layer 2: Linear(512 -> 512) + BatchNorm1d(512) + LeakyReLU(0.2)
    h2 = jnp.dot(h1.astype(wdt), w2_ref[...], preferred_element_type=jnp.float32)
    h2 = h2 + b2_ref[...]
    h2 = h2 * bn_scale_ref[...] + bn_shift_ref[...]   # folded eval-mode BN
    h2 = _leaky_relu(h2)

    # Heads: mu / logvar share the h2 activation.
    h2w = h2.astype(wdt)
    mu = jnp.dot(h2w, wmu_ref[...], preferred_element_type=jnp.float32) + bmu_ref[...]
    logvar = jnp.dot(h2w, wlv_ref[...], preferred_element_type=jnp.float32) + blv_ref[...]

    # Reparameterization: z = eps * exp(logvar / 2) + mu   (exp -> EUP slot)
    std = jnp.exp(0.5 * logvar)
    z_ref[...] = (eps_ref[...] * std + mu).astype(z_ref.dtype)


def encoder_forward(img, eps, params, *, block_b=256, weights_dtype=jnp.float32):
    """img: (B, C, H, W) f32, eps: (B, latent) f32 -> z: (B, latent) f32."""
    (w1, b1, w2, b2, gamma, beta, run_mean, run_var,
     wmu, bmu, wlv, blv) = params

    B = img.shape[0]
    x = img.reshape(B, -1).astype(jnp.float32)
    d_in = x.shape[1]
    hidden = w1.shape[1]
    latent = wmu.shape[1]
    assert w1.shape == (d_in, hidden)

    # Fold eval-mode BatchNorm1d into a per-feature scale / shift (f32).
    # TODO(synk): training-mode BatchNorm (batch statistics) would need a
    # cross-tile batch reduction; running-stat (eval) BN is used here.
    bn_eps = 1e-5
    bn_scale = (gamma / jnp.sqrt(run_var + bn_eps)).astype(jnp.float32)
    bn_shift = (beta - run_mean * bn_scale).astype(jnp.float32)

    # Only the matmul weights are optionally stored in bf16 (halves weight DMA,
    # doubles MXU rate). Biases / BN params stay f32 so all elementwise math is
    # f32 (v5e has no bf16 VPU/EUP).
    w1c, w2c, wmuc, wlvc = (w.astype(weights_dtype) for w in (w1, w2, wmu, wlv))

    # Batch tiling: TB rows per grid step (multiple of 8 sublanes). Pad B up to
    # a whole number of tiles; slice the padding off afterwards.
    tb = int(min(block_b, max(8, ((B + 7) // 8) * 8)))
    pad_b = pl.cdiv(B, tb) * tb
    if pad_b != B:
        x = jnp.pad(x, ((0, pad_b - B), (0, 0)))
        eps = jnp.pad(eps, ((0, pad_b - B), (0, 0)))

    def resident(arr):  # whole array as one block, constant across grid steps
        return pl.BlockSpec(arr.shape, lambda i: (0,) * arr.ndim)

    z = pl.pallas_call(
        encoder_kernel,
        out_shape=jax.ShapeDtypeStruct((pad_b, latent), jnp.float32),
        grid=(pad_b // tb,),
        in_specs=[
            pl.BlockSpec((tb, d_in), lambda i: (i, 0)),      # x tile (streams)
            pl.BlockSpec((tb, latent), lambda i: (i, 0)),    # eps tile (streams)
            resident(w1c), resident(b1),
            resident(w2c), resident(b2),
            resident(bn_scale), resident(bn_shift),
            resident(wmuc), resident(bmu),
            resident(wlvc), resident(blv),
        ],
        out_specs=pl.BlockSpec((tb, latent), lambda i: (i, 0)),
        compiler_params=pltpu.CompilerParams(
            dimension_semantics=("parallel",),
        ),
    )(x, eps, w1c, b1, w2c, b2, bn_scale, bn_shift, wmuc, bmu, wlvc, blv)

    return z[:B]


def init_params(key, d_in, hidden, latent):
    """PyTorch-like Linear init (U[-1/sqrt(fan_in), 1/sqrt(fan_in)]) plus
    randomized BatchNorm affine / running stats so the BN path is exercised.
    Weights stored as (in_features, out_features); biases as (1, out)."""
    k = jax.random.split(key, 12)

    def linear(kw, kb, fan_in, fan_out):
        bound = 1.0 / (fan_in ** 0.5)
        w = jax.random.uniform(kw, (fan_in, fan_out), minval=-bound,
                               maxval=bound, dtype=jnp.float32)
        b = jax.random.uniform(kb, (1, fan_out), minval=-bound,
                               maxval=bound, dtype=jnp.float32)
        return w, b

    w1, b1 = linear(k[0], k[1], d_in, hidden)
    w2, b2 = linear(k[2], k[3], hidden, hidden)
    wmu, bmu = linear(k[4], k[5], hidden, latent)
    wlv, blv = linear(k[6], k[7], hidden, latent)
    gamma = jax.random.uniform(k[8], (1, hidden), minval=0.5, maxval=1.5,
                               dtype=jnp.float32)
    beta = jax.random.uniform(k[9], (1, hidden), minval=-0.1, maxval=0.1,
                              dtype=jnp.float32)
    run_mean = 0.1 * jax.random.normal(k[10], (1, hidden), dtype=jnp.float32)
    run_var = jax.random.uniform(k[11], (1, hidden), minval=0.5, maxval=1.5,
                                 dtype=jnp.float32)
    return (w1, b1, w2, b2, gamma, beta, run_mean, run_var, wmu, bmu, wlv, blv)


def reference_forward(img, eps, params):
    """Plain-JAX reference (uses jax.nn.leaky_relu explicitly)."""
    (w1, b1, w2, b2, gamma, beta, run_mean, run_var,
     wmu, bmu, wlv, blv) = params
    x = img.reshape(img.shape[0], -1)
    h = jax.nn.leaky_relu(x @ w1 + b1, negative_slope=0.2)
    h = h @ w2 + b2
    h = (h - run_mean) / jnp.sqrt(run_var + 1e-5) * gamma + beta
    h = jax.nn.leaky_relu(h, negative_slope=0.2)
    mu = h @ wmu + bmu
    logvar = h @ wlv + blv
    return eps * jnp.exp(0.5 * logvar) + mu


if __name__ == "__main__":
    channels, img_size = 1, 16          # opt.channels, opt.img_size (small)
    latent_dim = 32                     # opt.latent_dim
    hidden = 512
    batch = 8

    d_in = channels * img_size * img_size

    key = jax.random.PRNGKey(0)
    k_params, k_img, k_eps = jax.random.split(key, 3)
    params = init_params(k_params, d_in, hidden, latent_dim)
    img = jax.random.normal(k_img, (batch, channels, img_size, img_size),
                            dtype=jnp.float32)
    eps = jax.random.normal(k_eps, (batch, latent_dim), dtype=jnp.float32)

    ref = reference_forward(img, eps, params)

    # f32 weight path: tight correctness check.
    z32 = jax.block_until_ready(encoder_forward(img, eps, params))
    assert z32.shape == (batch, latent_dim)
    assert jnp.allclose(z32, ref, atol=2e-4, rtol=2e-4), \
        "f32 kernel mismatch vs reference"

    # bf16 weight storage (f32 accumulation): DMA/MXU-optimized path.
    zbf = jax.block_until_ready(
        encoder_forward(img, eps, params, weights_dtype=jnp.bfloat16))
    assert zbf.shape == (batch, latent_dim)
    assert jnp.allclose(zbf, ref, atol=1.5e-1, rtol=1.5e-1), \
        "bf16 kernel mismatch vs reference"

    print("KERNEL_OK")
</pallas_src>

<mosaic_0001>
module attributes {stable_mosaic.version = 11 : i64} {
  func.func @encoder_kernel(%arg0: i32, %arg1: memref<8x256xf32, #tpu.memory_space<vmem>>, %arg2: memref<8x32xf32, #tpu.memory_space<vmem>>, %arg3: memref<256x512xf32, #tpu.memory_space<vmem>>, %arg4: memref<1x512xf32, #tpu.memory_space<vmem>>, %arg5: memref<512x512xf32, #tpu.memory_space<vmem>>, %arg6: memref<1x512xf32, #tpu.memory_space<vmem>>, %arg7: memref<1x512xf32, #tpu.memory_space<vmem>>, %arg8: memref<1x512xf32, #tpu.memory_space<vmem>>, %arg9: memref<512x32xf32, #tpu.memory_space<vmem>>, %arg10: memref<1x32xf32, #tpu.memory_space<vmem>>, %arg11: memref<512x32xf32, #tpu.memory_space<vmem>>, %arg12: memref<1x32xf32, #tpu.memory_space<vmem>>, %arg13: memref<8x32xf32, #tpu.memory_space<vmem>>) attributes {dimension_semantics = [#tpu.dimension_semantics<parallel>], iteration_bounds = array<i64: 1>, scalar_prefetch = 0 : i64, scratch_operands = 0 : i64, tpu.core_type = #tpu.core_type<tc>, window_params = [{transform_indices = @transform_0, window_bounds = array<i64: 8, 256>}, {transform_indices = @transform_1, window_bounds = array<i64: 8, 32>}, {pipeline_mode = #tpu.pipeline_mode<synchronous>, transform_indices = @transform_2, window_bounds = array<i64: 256, 512>}, {pipeline_mode = #tpu.pipeline_mode<synchronous>, transform_indices = @transform_3, window_bounds = array<i64: 1, 512>}, {pipeline_mode = #tpu.pipeline_mode<synchronous>, transform_indices = @transform_4, window_bounds = array<i64: 512, 512>}, {pipeline_mode = #tpu.pipeline_mode<synchronous>, transform_indices = @transform_5, window_bounds = array<i64: 1, 512>}, {pipeline_mode = #tpu.pipeline_mode<synchronous>, transform_indices = @transform_6, window_bounds = array<i64: 1, 512>}, {pipeline_mode = #tpu.pipeline_mode<synchronous>, transform_indices = @transform_7, window_bounds = array<i64: 1, 512>}, {pipeline_mode = #tpu.pipeline_mode<synchronous>, transform_indices = @transform_8, window_bounds = array<i64: 512, 32>}, {pipeline_mode = #tpu.pipeline_mode<synchronous>, transform_indices = @transform_9, window_bounds = array<i64: 1, 32>}, {pipeline_mode = #tpu.pipeline_mode<synchronous>, transform_indices = @transform_10, window_bounds = array<i64: 512, 32>}, {pipeline_mode = #tpu.pipeline_mode<synchronous>, transform_indices = @transform_11, window_bounds = array<i64: 1, 32>}, {transform_indices = @transform_12, window_bounds = array<i64: 8, 32>}]} {
    %c0 = arith.constant 0 : index
    %c0_0 = arith.constant 0 : index
    %0 = vector.load %arg1[%c0, %c0_0] : memref<8x256xf32, #tpu.memory_space<vmem>>, vector<8x256xf32>
    %c0_1 = arith.constant 0 : index
    %c0_2 = arith.constant 0 : index
    %1 = vector.load %arg3[%c0_1, %c0_2] : memref<256x512xf32, #tpu.memory_space<vmem>>, vector<256x512xf32>
    %cst = arith.constant dense<0.000000e+00> : vector<8x512xf32>
    %2 = tpu.matmul %0, %1, %cst {dimension_numbers = #tpu.dot_dimension_numbers<[1], [0], [0], [1], [0, 0, 1, 1], [], []>} : vector<8x256xf32>, vector<256x512xf32>, vector<8x512xf32> -> vector<8x512xf32>
    %c0_3 = arith.constant 0 : index
    %c0_4 = arith.constant 0 : index
    %3 = vector.load %arg4[%c0_3, %c0_4] : memref<1x512xf32, #tpu.memory_space<vmem>>, vector<1x512xf32>
    %4 = vector.broadcast %3 : vector<1x512xf32> to vector<8x512xf32>
    %5 = arith.addf %2, %4 : vector<8x512xf32>
    %cst_5 = arith.constant 0.000000e+00 : f32
    %6 = vector.broadcast %cst_5 : f32 to vector<8x512xf32>
    %7 = arith.cmpf ogt, %5, %6 : vector<8x512xf32>
    %cst_6 = arith.constant 2.000000e-01 : f32
    %8 = vector.broadcast %cst_6 : f32 to vector<8x512xf32>
    %9 = arith.mulf %8, %5 : vector<8x512xf32>
    %10 = arith.select %7, %5, %9 : vector<8x512xi1>, vector<8x512xf32>
    %c0_7 = arith.constant 0 : index
    %c0_8 = arith.constant 0 : index
    %11 = vector.load %arg5[%c0_7, %c0_8] : memref<512x512xf32, #tpu.memory_space<vmem>>, vector<512x512xf32>
    %cst_9 = arith.constant dense<0.000000e+00> : vector<8x512xf32>
    %12 = tpu.matmul %10, %11, %cst_9 {dimension_numbers = #tpu.dot_dimension_numbers<[1], [0], [0], [1], [0, 0, 1, 1], [], []>} : vector<8x512xf32>, vector<512x512xf32>, vector<8x512xf32> -> vector<8x512xf32>
    %c0_10 = arith.constant 0 : index
    %c0_11 = arith.constant 0 : index
    %13 = vector.load %arg6[%c0_10, %c0_11] : memref<1x512xf32, #tpu.memory_space<vmem>>, vector<1x512xf32>
    %14 = vector.broadcast %13 : vector<1x512xf32> to vector<8x512xf32>
    %15 = arith.addf %12, %14 : vector<8x512xf32>
    %c0_12 = arith.constant 0 : index
    %c0_13 = arith.constant 0 : index
    %16 = vector.load %arg7[%c0_12, %c0_13] : memref<1x512xf32, #tpu.memory_space<vmem>>, vector<1x512xf32>
    %17 = vector.broadcast %16 : vector<1x512xf32> to vector<8x512xf32>
    %18 = arith.mulf %15, %17 : vector<8x512xf32>
    %c0_14 = arith.constant 0 : index
    %c0_15 = arith.constant 0 : index
    %19 = vector.load %arg8[%c0_14, %c0_15] : memref<1x512xf32, #tpu.memory_space<vmem>>, vector<1x512xf32>
    %20 = vector.broadcast %19 : vector<1x512xf32> to vector<8x512xf32>
    %21 = arith.addf %18, %20 : vector<8x512xf32>
    %cst_16 = arith.constant 0.000000e+00 : f32
    %22 = vector.broadcast %cst_16 : f32 to vector<8x512xf32>
    %23 = arith.cmpf ogt, %21, %22 : vector<8x512xf32>
    %cst_17 = arith.constant 2.000000e-01 : f32
    %24 = vector.broadcast %cst_17 : f32 to vector<8x512xf32>
    %25 = arith.mulf %24, %21 : vector<8x512xf32>
    %26 = arith.select %23, %21, %25 : vector<8x512xi1>, vector<8x512xf32>
    %c0_18 = arith.constant 0 : index
    %c0_19 = arith.constant 0 : index
    %27 = vector.load %arg9[%c0_18, %c0_19] : memref<512x32xf32, #tpu.memory_space<vmem>>, vector<512x32xf32>
    %cst_20 = arith.constant dense<0.000000e+00> : vector<8x32xf32>
    %28 = tpu.matmul %26, %27, %cst_20 {dimension_numbers = #tpu.dot_dimension_numbers<[1], [0], [0], [1], [0, 0, 1, 1], [], []>} : vector<8x512xf32>, vector<512x32xf32>, vector<8x32xf32> -> vector<8x32xf32>
    %c0_21 = arith.constant 0 : index
    %c0_22 = arith.constant 0 : index
    %29 = vector.load %arg10[%c0_21, %c0_22] : memref<1x32xf32, #tpu.memory_space<vmem>>, vector<1x32xf32>
    %30 = vector.broadcast %29 : vector<1x32xf32> to vector<8x32xf32>
    %31 = arith.addf %28, %30 : vector<8x32xf32>
    %c0_23 = arith.constant 0 : index
    %c0_24 = arith.constant 0 : index
    %32 = vector.load %arg11[%c0_23, %c0_24] : memref<512x32xf32, #tpu.memory_space<vmem>>, vector<512x32xf32>
    %cst_25 = arith.constant dense<0.000000e+00> : vector<8x32xf32>
    %33 = tpu.matmul %26, %32, %cst_25 {dimension_numbers = #tpu.dot_dimension_numbers<[1], [0], [0], [1], [0, 0, 1, 1], [], []>} : vector<8x512xf32>, vector<512x32xf32>, vector<8x32xf32> -> vector<8x32xf32>
    %c0_26 = arith.constant 0 : index
    %c0_27 = arith.constant 0 : index
    %34 = vector.load %arg12[%c0_26, %c0_27] : memref<1x32xf32, #tpu.memory_space<vmem>>, vector<1x32xf32>
    %35 = vector.broadcast %34 : vector<1x32xf32> to vector<8x32xf32>
    %36 = arith.addf %33, %35 : vector<8x32xf32>
    %cst_28 = arith.constant 5.000000e-01 : f32
    %37 = vector.broadcast %cst_28 : f32 to vector<8x32xf32>
    %38 = arith.mulf %37, %36 : vector<8x32xf32>
    %39 = math.exp %38 : vector<8x32xf32>
    %c0_29 = arith.constant 0 : index
    %c0_30 = arith.constant 0 : index
    %40 = vector.load %arg2[%c0_29, %c0_30] : memref<8x32xf32, #tpu.memory_space<vmem>>, vector<8x32xf32>
    %41 = arith.mulf %40, %39 : vector<8x32xf32>
    %42 = arith.addf %41, %31 : vector<8x32xf32>
    %c0_31 = arith.constant 0 : index
    %c0_32 = arith.constant 0 : index
    %43 = vector.load %arg13[%c0_31, %c0_32] : memref<8x32xf32, #tpu.memory_space<vmem>>, vector<8x32xf32>
    tpu.vector_store %arg13[%c0_31, %c0_32], %42 {strides = array<i32>} : memref<8x32xf32, #tpu.memory_space<vmem>>, vector<8x32xf32>,
    return
  }
  func.func @transform_0(%arg0: i32) -> (i32, i32) {
    %c0_i32 = arith.constant 0 : i32
    %c0_i32_0 = arith.constant 0 : i32
    return %arg0, %c0_i32 : i32, i32
  }
  func.func @transform_1(%arg0: i32) -> (i32, i32) {
    %c0_i32 = arith.constant 0 : i32
    %c0_i32_0 = arith.constant 0 : i32
    return %arg0, %c0_i32 : i32, i32
  }
  func.func @transform_2(%arg0: i32) -> (i32, i32) {
    %c0_i32 = arith.constant 0 : i32
    %c0_i32_0 = arith.constant 0 : i32
    %c0_i32_1 = arith.constant 0 : i32
    return %c0_i32, %c0_i32_0 : i32, i32
  }
  func.func @transform_3(%arg0: i32) -> (i32, i32) {
    %c0_i32 = arith.constant 0 : i32
    %c0_i32_0 = arith.constant 0 : i32
    %c0_i32_1 = arith.constant 0 : i32
    return %c0_i32, %c0_i32_0 : i32, i32
  }
  func.func @transform_4(%arg0: i32) -> (i32, i32) {
    %c0_i32 = arith.constant 0 : i32
    %c0_i32_0 = arith.constant 0 : i32
    %c0_i32_1 = arith.constant 0 : i32
    return %c0_i32, %c0_i32_0 : i32, i32
  }
  func.func @transform_5(%arg0: i32) -> (i32, i32) {
    %c0_i32 = arith.constant 0 : i32
    %c0_i32_0 = arith.constant 0 : i32
    %c0_i32_1 = arith.constant 0 : i32
    return %c0_i32, %c0_i32_0 : i32, i32
  }
  func.func @transform_6(%arg0: i32) -> (i32, i32) {
    %c0_i32 = arith.constant 0 : i32
    %c0_i32_0 = arith.constant 0 : i32
    %c0_i32_1 = arith.constant 0 : i32
    return %c0_i32, %c0_i32_0 : i32, i32
  }
  func.func @transform_7(%arg0: i32) -> (i32, i32) {
    %c0_i32 = arith.constant 0 : i32
    %c0_i32_0 = arith.constant 0 : i32
    %c0_i32_1 = arith.constant 0 : i32
    return %c0_i32, %c0_i32_0 : i32, i32
  }
  func.func @transform_8(%arg0: i32) -> (i32, i32) {
    %c0_i32 = arith.constant 0 : i32
    %c0_i32_0 = arith.constant 0 : i32
    %c0_i32_1 = arith.constant 0 : i32
    return %c0_i32, %c0_i32_0 : i32, i32
  }
  func.func @transform_9(%arg0: i32) -> (i32, i32) {
    %c0_i32 = arith.constant 0 : i32
    %c0_i32_0 = arith.constant 0 : i32
    %c0_i32_1 = arith.constant 0 : i32
    return %c0_i32, %c0_i32_0 : i32, i32
  }
  func.func @transform_10(%arg0: i32) -> (i32, i32) {
    %c0_i32 = arith.constant 0 : i32
    %c0_i32_0 = arith.constant 0 : i32
    %c0_i32_1 = arith.constant 0 : i32
    return %c0_i32, %c0_i32_0 : i32, i32
  }
  func.func @transform_11(%arg0: i32) -> (i32, i32) {
    %c0_i32 = arith.constant 0 : i32
    %c0_i32_0 = arith.constant 0 : i32
    %c0_i32_1 = arith.constant 0 : i32
    return %c0_i32, %c0_i32_0 : i32, i32
  }
  func.func @transform_12(%arg0: i32) -> (i32, i32) {
    %c0_i32 = arith.constant 0 : i32
    %c0_i32_0 = arith.constant 0 : i32
    return %arg0, %c0_i32 : i32, i32
  }
}

</mosaic_0001>

<llo_original>
// kernel: tpu_custom_call.1
$region0: #{tpu_custom_call.1}
  #allocation0 [shape = 'u32[]', space=smem, size = 0x4, offset = 0x4, fixed_abs, tag = 'smem constant byte address 0x4 - core index']
  #allocation1 [shape = 'u32[144,128]{1,0:T(1,128)}', space=vmem, size = 0x12000, scoped, tag = 'internal scratch']
  %s0 = inlined_call_operand.vmem [shape: f32[8,256], index: 0, kind: input, shape index: {}]
  %s1 = inlined_call_operand.vmem [shape: f32[8,32], index: 1, kind: input, shape index: {}]
  %s2 = inlined_call_operand.vmem [shape: f32[256,512], index: 2, kind: input, shape index: {}]
  %s3 = inlined_call_operand.vmem [shape: f32[1,512], index: 3, kind: input, shape index: {}]
  %s4 = inlined_call_operand.hbm [shape: f32[512,512], index: 4, kind: input, shape index: {}]
  %s5 = inlined_call_operand.vmem [shape: f32[1,512], index: 5, kind: input, shape index: {}]
  %s6 = inlined_call_operand.vmem [shape: f32[1,512], index: 6, kind: input, shape index: {}]
  %s7 = inlined_call_operand.vmem [shape: f32[1,512], index: 7, kind: input, shape index: {}]
  %s8 = inlined_call_operand.vmem [shape: f32[512,32], index: 8, kind: input, shape index: {}]
  %s9 = inlined_call_operand.vmem [shape: f32[1,32], index: 9, kind: input, shape index: {}]
  %s10 = inlined_call_operand.vmem [shape: f32[512,32], index: 10, kind: input, shape index: {}]
  %s11 = inlined_call_operand.vmem [shape: f32[1,32], index: 11, kind: input, shape index: {}]
  %s12 = inlined_call_operand.hbm [shape: f32[8,32], index: 12, kind: output, shape index: {}]
  %s13 = sld [smem:[#allocation0]]
  $region62: #{tpu_custom_call.1} parent=0
    _
  %s15 = ssub.s32 1, %s13
  %s16 = scalar_select 0, %s15, %s13
  $region1: #{tpu_custom_call.1} parent=0
    #allocation2 [shape = 'u8[1048576]{0}', space=vmem, size = 0x100000, scoped, tag = 'input window, operand 4, single buffered']
    #allocation3 [shape = 's32[1]{0}', space=sflag, size = 0x4, scoped, tag = 'scoped memory for tpu_custom_call.1']
    #allocation4 [shape = 's32[1]{0}', space=sflag, size = 0x4, scoped, tag = 'scoped memory for tpu_custom_call.1']
    #allocation5 [shape = 'u8[4096]{0}', space=vmem, size = 0x1000, scoped, tag = 'output window, operand 0, single buffered']
    %17 = vsyncpa [#allocation3], 0
    %18 = vsyncpa [#allocation4], 0
    // Predicated region
    $region2: #{tpu_custom_call.1} parent=1 // pred_check
      _
    $region3: #{tpu_custom_call.1} parent=1 // pred_check_branch
      %20 = sbr.rel (0) target = $region5
    $region4: #{tpu_custom_call.1} parent=1 // pred_region
      _
    $region5: #{tpu_custom_call.1} parent=1 // pred_fallthru
      _
    // Predicated region
    $region6: #{tpu_custom_call.1} parent=1 // pred_check
      _
    $region7: #{tpu_custom_call.1} parent=1 // pred_check_branch
      %22 = sbr.rel (0) target = $region9
    $region8: #{tpu_custom_call.1} parent=1 // pred_region
      _
    $region9: #{tpu_custom_call.1} parent=1 // pred_fallthru
      _
    // Predicated region
    $region10: #{tpu_custom_call.1} parent=1 // pred_check
      _
    $region11: #{tpu_custom_call.1} parent=1 // pred_check_branch
      %24 = sbr.rel (0) target = $region13
    $region12: #{tpu_custom_call.1} parent=1 // pred_region
      _
    $region13: #{tpu_custom_call.1} parent=1 // pred_fallthru
      _
    // Predicated region
    $region14: #{tpu_custom_call.1} parent=1 // pred_check
      _
    $region15: #{tpu_custom_call.1} parent=1 // pred_check_branch
      %26 = sbr.rel (0) target = $region17
    $region16: #{tpu_custom_call.1} parent=1 // pred_region
      _
    $region17: #{tpu_custom_call.1} parent=1 // pred_fallthru
      _
    // Predicated region
    $region18: #{tpu_custom_call.1} parent=1 // pred_check
      _
    $region19: #{tpu_custom_call.1} parent=1 // pred_check_branch
      %28 = sbr.rel (0) target = $region21
    $region20: #{tpu_custom_call.1} parent=1 // pred_region
      %s30 = ssub.s32 32768, 32768
      %31 = vsyncadd [#allocation3], %s30
      %s32 = sshll.u32 [#allocation2], 4
      %s33 = int_to_ptr.vmem [resolvable:$true] %s32
      %38 = dma.hbm_to_vmem [thread:$0]  %s4, 32768, %s33, [#allocation3], 512, 512, 32
    $region21: #{tpu_custom_call.1} parent=1 // pred_fallthru
      _
    // Predicated region
    $region22: #{tpu_custom_call.1} parent=1 // pred_check
      _
    $region23: #{tpu_custom_call.1} parent=1 // pred_check_branch
      %40 = sbr.rel (0) target = $region25
    $region24: #{tpu_custom_call.1} parent=1 // pred_region
      _
    $region25: #{tpu_custom_call.1} parent=1 // pred_fallthru
      _
    // Predicated region
    $region26: #{tpu_custom_call.1} parent=1 // pred_check
      _
    $region27: #{tpu_custom_call.1} parent=1 // pred_check_branch
      %42 = sbr.rel (0) target = $region29
    $region28: #{tpu_custom_call.1} parent=1 // pred_region
      _
    $region29: #{tpu_custom_call.1} parent=1 // pred_fallthru
      _
    // Predicated region
    $region30: #{tpu_custom_call.1} parent=1 // pred_check
      _
    $region31: #{tpu_custom_call.1} parent=1 // pred_check_branch
      %44 = sbr.rel (0) target = $region33
    $region32: #{tpu_custom_call.1} parent=1 // pred_region
      _
    $region33: #{tpu_custom_call.1} parent=1 // pred_fallthru
      _
    // Predicated region
    $region34: #{tpu_custom_call.1} parent=1 // pred_check
      _
    $region35: #{tpu_custom_call.1} parent=1 // pred_check_branch
      %46 = sbr.rel (0) target = $region37
    $region36: #{tpu_custom_call.1} parent=1 // pred_region
      _
    $region37: #{tpu_custom_call.1} parent=1 // pred_fallthru
      _
    // Predicated region
    $region38: #{tpu_custom_call.1} parent=1 // pred_check
      _
    $region39: #{tpu_custom_call.1} parent=1 // pred_check_branch
      %48 = sbr.rel (0) target = $region41
    $region40: #{tpu_custom_call.1} parent=1 // pred_region
      _
    $region41: #{tpu_custom_call.1} parent=1 // pred_fallthru
      _
    // Predicated region
    $region42: #{tpu_custom_call.1} parent=1 // pred_check
      _
    $region43: #{tpu_custom_call.1} parent=1 // pred_check_branch
      %50 = sbr.rel (0) target = $region45
    $region44: #{tpu_custom_call.1} parent=1 // pred_region
      _
    $region45: #{tpu_custom_call.1} parent=1 // pred_fallthru
      _
    // Predicated region
    $region46: #{tpu_custom_call.1} parent=1 // pred_check
      _
    $region47: #{tpu_custom_call.1} parent=1 // pred_check_branch
      %52 = sbr.rel (0) target = $region49
    $region48: #{tpu_custom_call.1} parent=1 // pred_region
      _
    $region49: #{tpu_custom_call.1} parent=1 // pred_fallthru
      _
    // Predicated region
    $region50: #{tpu_custom_call.1} parent=1 // pred_check
      _
    $region51: #{tpu_custom_call.1} parent=1 // pred_check_branch
      %54 = sbr.rel (0) target = $region53
    $region52: #{tpu_custom_call.1} parent=1 // pred_region
      %55 = dma.done [#allocation3], 32768
    $region53: #{tpu_custom_call.1} parent=1 // pred_fallthru
      _
    %v56 = vld [vmem:[%s0] sm:$0xff]
    %v57 = vld [vmem:[%s0 + $0x8] sm:$0xff]
    %v58 = vld [vmem:[%s2] sm:$0xff]
    %v59 = vld [vmem:[%s2 + $0x8] sm:$0xff]
    %v60 = vld [vmem:[%s2 + $0x10] sm:$0xff]
    %v61 = vld [vmem:[%s2 + $0x18] sm:$0xff]
    %v62 = vld [vmem:[%s2 + $0x20] sm:$0xff]
    %v63 = vld [vmem:[%s2 + $0x28] sm:$0xff]
    %v64 = vld [vmem:[%s2 + $0x30] sm:$0xff]
    %v65 = vld [vmem:[%s2 + $0x38] sm:$0xff]
    %v66 = vld [vmem:[%s2 + $0x40] sm:$0xff]
    %v67 = vld [vmem:[%s2 + $0x48] sm:$0xff]
    %v68 = vld [vmem:[%s2 + $0x50] sm:$0xff]
    %v69 = vld [vmem:[%s2 + $0x58] sm:$0xff]
    %v70 = vld [vmem:[%s2 + $0x60] sm:$0xff]
    %v71 = vld [vmem:[%s2 + $0x68] sm:$0xff]
    %v72 = vld [vmem:[%s2 + $0x70] sm:$0xff]
    %v73 = vld [vmem:[%s2 + $0x78] sm:$0xff]
    %v74 = vld [vmem:[%s2 + $0x80] sm:$0xff]
    %v75 = vld [vmem:[%s2 + $0x88] sm:$0xff]
    %v76 = vld [vmem:[%s2 + $0x90] sm:$0xff]
    %v77 = vld [vmem:[%s2 + $0x98] sm:$0xff]
    %v78 = vld [vmem:[%s2 + $0xa0] sm:$0xff]
    %v79 = vld [vmem:[%s2 + $0xa8] sm:$0xff]
    %v80 = vld [vmem:[%s2 + $0xb0] sm:$0xff]
    %v81 = vld [vmem:[%s2 + $0xb8] sm:$0xff]
    %v82 = vld [vmem:[%s2 + $0xc0] sm:$0xff]
    %v83 = vld [vmem:[%s2 + $0xc8] sm:$0xff]
    %v84 = vld [vmem:[%s2 + $0xd0] sm:$0xff]
    %v85 = vld [vmem:[%s2 + $0xd8] sm:$0xff]
    %v86 = vld [vmem:[%s2 + $0xe0] sm:$0xff]
    %v87 = vld [vmem:[%s2 + $0xe8] sm:$0xff]
    %v88 = vld [vmem:[%s2 + $0xf0] sm:$0xff]
    %v89 = vld [vmem:[%s2 + $0xf8] sm:$0xff]
    %v90 = vld [vmem:[%s2 + $0x100] sm:$0xff]
    %v91 = vld [vmem:[%s2 + $0x108] sm:$0xff]
    %v92 = vld [vmem:[%s2 + $0x110] sm:$0xff]
    %v93 = vld [vmem:[%s2 + $0x118] sm:$0xff]
    %v94 = vld [vmem:[%s2 + $0x120] sm:$0xff]
    %v95 = vld [vmem:[%s2 + $0x128] sm:$0xff]
    %v96 = vld [vmem:[%s2 + $0x130] sm:$0xff]
    %v97 = vld [vmem:[%s2 + $0x138] sm:$0xff]
    %v98 = vld [vmem:[%s2 + $0x140] sm:$0xff]
    %v99 = vld [vmem:[%s2 + $0x148] sm:$0xff]
    %v100 = vld [vmem:[%s2 + $0x150] sm:$0xff]
    %v101 = vld [vmem:[%s2 + $0x158] sm:$0xff]
    %v102 = vld [vmem:[%s2 + $0x160] sm:$0xff]
    %v103 = vld [vmem:[%s2 + $0x168] sm:$0xff]
    %v104 = vld [vmem:[%s2 + $0x170] sm:$0xff]
    %v105 = vld [vmem:[%s2 + $0x178] sm:$0xff]
    %v106 = vld [vmem:[%s2 + $0x180] sm:$0xff]
    %v107 = vld [vmem:[%s2 + $0x188] sm:$0xff]
    %v108 = vld [vmem:[%s2 + $0x190] sm:$0xff]
    %v109 = vld [vmem:[%s2 + $0x198] sm:$0xff]
    %v110 = vld [vmem:[%s2 + $0x1a0] sm:$0xff]
    %v111 = vld [vmem:[%s2 + $0x1a8] sm:$0xff]
    %v112 = vld [vmem:[%s2 + $0x1b0] sm:$0xff]
    %v113 = vld [vmem:[%s2 + $0x1b8] sm:$0xff]
    %v114 = vld [vmem:[%s2 + $0x1c0] sm:$0xff]
    %v115 = vld [vmem:[%s2 + $0x1c8] sm:$0xff]
    %v116 = vld [vmem:[%s2 + $0x1d0] sm:$0xff]
    %v117 = vld [vmem:[%s2 + $0x1d8] sm:$0xff]
    %v118 = vld [vmem:[%s2 + $0x1e0] sm:$0xff]
    %v119 = vld [vmem:[%s2 + $0x1e8] sm:$0xff]
    %v120 = vld [vmem:[%s2 + $0x1f0] sm:$0xff]
    %v121 = vld [vmem:[%s2 + $0x1f8] sm:$0xff]
    %v122 = vld [vmem:[%s2 + $0x200] sm:$0xff]
    %v123 = vld [vmem:[%s2 + $0x208] sm:$0xff]
    %v124 = vld [vmem:[%s2 + $0x210] sm:$0xff]
    %v125 = vld [vmem:[%s2 + $0x218] sm:$0xff]
    %v126 = vld [vmem:[%s2 + $0x220] sm:$0xff]
    %v127 = vld [vmem:[%s2 + $0x228] sm:$0xff]
    %v128 = vld [vmem:[%s2 + $0x230] sm:$0xff]
    %v129 = vld [vmem:[%s2 + $0x238] sm:$0xff]
    %v130 = vld [vmem:[%s2 + $0x240] sm:$0xff]
    %v131 = vld [vmem:[%s2 + $0x248] sm:$0xff]
    %v132 = vld [vmem:[%s2 + $0x250] sm:$0xff]
    %v133 = vld [vmem:[%s2 + $0x258] sm:$0xff]
    %v134 = vld [vmem:[%s2 + $0x260] sm:$0xff]
    %v135 = vld [vmem:[%s2 + $0x268] sm:$0xff]
    %v136 = vld [vmem:[%s2 + $0x270] sm:$0xff]
    %v137 = vld [vmem:[%s2 + $0x278] sm:$0xff]
    %v138 = vld [vmem:[%s2 + $0x280] sm:$0xff]
    %v139 = vld [vmem:[%s2 + $0x288] sm:$0xff]
    %v140 = vld [vmem:[%s2 + $0x290] sm:$0xff]
    %v141 = vld [vmem:[%s2 + $0x298] sm:$0xff]
    %v142 = vld [vmem:[%s2 + $0x2a0] sm:$0xff]
    %v143 = vld [vmem:[%s2 + $0x2a8] sm:$0xff]
    %v144 = vld [vmem:[%s2 + $0x2b0] sm:$0xff]
    %v145 = vld [vmem:[%s2 + $0x2b8] sm:$0xff]
    %v146 = vld [vmem:[%s2 + $0x2c0] sm:$0xff]
    %v147 = vld [vmem:[%s2 + $0x2c8] sm:$0xff]
    %v148 = vld [vmem:[%s2 + $0x2d0] sm:$0xff]
    %v149 = vld [vmem:[%s2 + $0x2d8] sm:$0xff]
    %v150 = vld [vmem:[%s2 + $0x2e0] sm:$0xff]
    %v151 = vld [vmem:[%s2 + $0x2e8] sm:$0xff]
    %v152 = vld [vmem:[%s2 + $0x2f0] sm:$0xff]
    %v153 = vld [vmem:[%s2 + $0x2f8] sm:$0xff]
    %v154 = vld [vmem:[%s2 + $0x300] sm:$0xff]
    %v155 = vld [vmem:[%s2 + $0x308] sm:$0xff]
    %v156 = vld [vmem:[%s2 + $0x310] sm:$0xff]
    %v157 = vld [vmem:[%s2 + $0x318] sm:$0xff]
    %v158 = vld [vmem:[%s2 + $0x320] sm:$0xff]
    %v159 = vld [vmem:[%s2 + $0x328] sm:$0xff]
    %v160 = vld [vmem:[%s2 + $0x330] sm:$0xff]
    %v161 = vld [vmem:[%s2 + $0x338] sm:$0xff]
    %v162 = vld [vmem:[%s2 + $0x340] sm:$0xff]
    %v163 = vld [vmem:[%s2 + $0x348] sm:$0xff]
    %v164 = vld [vmem:[%s2 + $0x350] sm:$0xff]
    %v165 = vld [vmem:[%s2 + $0x358] sm:$0xff]
    %v166 = vld [vmem:[%s2 + $0x360] sm:$0xff]
    %v167 = vld [vmem:[%s2 + $0x368] sm:$0xff]
    %v168 = vld [vmem:[%s2 + $0x370] sm:$0xff]
    %v169 = vld [vmem:[%s2 + $0x378] sm:$0xff]
    %v170 = vld [vmem:[%s2 + $0x380] sm:$0xff]
    %v171 = vld [vmem:[%s2 + $0x388] sm:$0xff]
    %v172 = vld [vmem:[%s2 + $0x390] sm:$0xff]
    %v173 = vld [vmem:[%s2 + $0x398] sm:$0xff]
    %v174 = vld [vmem:[%s2 + $0x3a0] sm:$0xff]
    %v175 = vld [vmem:[%s2 + $0x3a8] sm:$0xff]
    %v176 = vld [vmem:[%s2 + $0x3b0] sm:$0xff]
    %v177 = vld [vmem:[%s2 + $0x3b8] sm:$0xff]
    %v178 = vld [vmem:[%s2 + $0x3c0] sm:$0xff]
    %v179 = vld [vmem:[%s2 + $0x3c8] sm:$0xff]
    %v180 = vld [vmem:[%s2 + $0x3d0] sm:$0xff]
    %v181 = vld [vmem:[%s2 + $0x3d8] sm:$0xff]
    %v182 = vld [vmem:[%s2 + $0x3e0] sm:$0xff]
    %v183 = vld [vmem:[%s2 + $0x3e8] sm:$0xff]
    %v184 = vld [vmem:[%s2 + $0x3f0] sm:$0xff]
    %v185 = vld [vmem:[%s2 + $0x3f8] sm:$0xff]
    %v186 = vld [vmem:[%s3] sm:$0xf]
    %v188 = vlaneseq
    %v189 = vshrl.u32 %v188, 7
    %v190 = vsub.s32 0, %v189
    %v191 = vrot.slane %v186, %v190
    %v192 = vlaneseq
    %v193 = vshrl.u32 %v192, 7
    %v194 = vsub.s32 1, %v193
    %v195 = vrot.slane %v186, %v194
    %v196 = vlaneseq
    %v197 = vshrl.u32 %v196, 7
    %v198 = vsub.s32 2, %v197
    %v199 = vrot.slane %v186, %v198
    %v200 = vlaneseq
    %v201 = vshrl.u32 %v200, 7
    %v202 = vsub.s32 3, %v201
    %v203 = vrot.slane %v186, %v202
    %208 = vmatprep.subr.mxu0 %v59
    %209 = vmatpush1.msra.mxu0 %v58
    %210 = vmatprep.subr.mxu0 %v63
    %211 = vmatpush1.msra.mxu0 %v62
    %212 = vmatprep.subr.mxu0 %v67
    %213 = vmatpush1.msra.mxu0 %v66
    %214 = vmatprep.subr.mxu0 %v71
    %215 = vmatpush1.msra.mxu0 %v70
    %216 = vmatprep.subr.mxu0 %v75
    %217 = vmatpush1.msra.mxu0 %v74
    %218 = vmatprep.subr.mxu0 %v79
    %219 = vmatpush1.msra.mxu0 %v78
    %220 = vmatprep.subr.mxu0 %v83
    %221 = vmatpush1.msra.mxu0 %v82
    %222 = vmatprep.subr.mxu0 %v87
    %223 = vmatpush1.msra.mxu0 %v86
    %224 = vmatprep.subr.mxu0 %v91
    %225 = vmatpush1.msra.mxu0 %v90
    %226 = vmatprep.subr.mxu0 %v95
    %227 = vmatpush1.msra.mxu0 %v94
    %228 = vmatprep.subr.mxu0 %v99
    %229 = vmatpush1.msra.mxu0 %v98
    %230 = vmatprep.subr.mxu0 %v103
    %231 = vmatpush1.msra.mxu0 %v102
    %232 = vmatprep.subr.mxu0 %v107
    %233 = vmatpush1.msra.mxu0 %v106
    %234 = vmatprep.subr.mxu0 %v111
    %235 = vmatpush1.msra.mxu0 %v110
    %236 = vmatprep.subr.mxu0 %v115
    %237 = vmatpush1.msra.mxu0 %v114
    %238 = vmatprep.subr.mxu0 %v119
    %239 = vmatpush1.msra.mxu0 %v118
    %240 = vmatprep.subr.mxu0 %v123
    %241 = vmatpush1.msra.mxu0 %v122
    %242 = vmatprep.subr.mxu0 %v127
    %243 = vmatpush1.msra.mxu0 %v126
    %244 = vmatprep.subr.mxu0 %v131
    %245 = vmatpush1.msra.mxu0 %v130
    %246 = vmatprep.subr.mxu0 %v135
    %247 = vmatpush1.msra.mxu0 %v134
    %248 = vmatprep.subr.mxu0 %v139
    %249 = vmatpush1.msra.mxu0 %v138
    %250 = vmatprep.subr.mxu0 %v143
    %251 = vmatpush1.msra.mxu0 %v142
    %252 = vmatprep.subr.mxu0 %v147
    %253 = vmatpush1.msra.mxu0 %v146
    %254 = vmatprep.subr.mxu0 %v151
    %255 = vmatpush1.msra.mxu0 %v150
    %256 = vmatprep.subr.mxu0 %v155
    %257 = vmatpush1.msra.mxu0 %v154
    %258 = vmatprep.subr.mxu0 %v159
    %259 = vmatpush1.msra.mxu0 %v158
    %260 = vmatprep.subr.mxu0 %v163
    %261 = vmatpush1.msra.mxu0 %v162
    %262 = vmatprep.subr.mxu0 %v167
    %263 = vmatpush1.msra.mxu0 %v166
    %264 = vmatprep.subr.mxu0 %v171
    %265 = vmatpush1.msra.mxu0 %v170
    %266 = vmatprep.subr.mxu0 %v175
    %267 = vmatpush1.msra.mxu0 %v174
    %268 = vmatprep.subr.mxu0 %v179
    %269 = vmatpush1.msra.mxu0 %v178
    %270 = vmatprep.subr.mxu0 %v183
    %271 = vmatpush1.msra.mxu0 %v182
    %272 = vmatprep.mubr.f32.mxu0 %v57
    %273 = vmatmul.mubr.f32.gmra.mrb[0].mxu0 %v56
    %v274 = vpop.f32.mrb[0].mxu0
    %v275 = vadd.f32 %v191, %v274
    %v276 = vpop.f32.mrb[0].mxu0
    %v277 = vadd.f32 %v195, %v276
    %278 = vdwg.mxu0
    %279 = vmatprep.subr.mxu0 %v61
    %280 = vmatpush1.msra.mxu0 %v60
    %281 = vmatprep.subr.mxu0 %v65
    %282 = vmatpush1.msra.mxu0 %v64
    %283 = vmatprep.subr.mxu0 %v69
    %284 = vmatpush1.msra.mxu0 %v68
    %285 = vmatprep.subr.mxu0 %v73
    %286 = vmatpush1.msra.mxu0 %v72
    %287 = vmatprep.subr.mxu0 %v77
    %288 = vmatpush1.msra.mxu0 %v76
    %289 = vmatprep.subr.mxu0 %v81
    %290 = vmatpush1.msra.mxu0 %v80
    %291 = vmatprep.subr.mxu0 %v85
    %292 = vmatpush1.msra.mxu0 %v84
    %293 = vmatprep.subr.mxu0 %v89
    %294 = vmatpush1.msra.mxu0 %v88
    %295 = vmatprep.subr.mxu0 %v93
    %296 = vmatpush1.msra.mxu0 %v92
    %297 = vmatprep.subr.mxu0 %v97
    %298 = vmatpush1.msra.mxu0 %v96
    %299 = vmatprep.subr.mxu0 %v101
    %300 = vmatpush1.msra.mxu0 %v100
    %301 = vmatprep.subr.mxu0 %v105
    %302 = vmatpush1.msra.mxu0 %v104
    %303 = vmatprep.subr.mxu0 %v109
    %304 = vmatpush1.msra.mxu0 %v108
    %305 = vmatprep.subr.mxu0 %v113
    %306 = vmatpush1.msra.mxu0 %v112
    %307 = vmatprep.subr.mxu0 %v117
    %308 = vmatpush1.msra.mxu0 %v116
    %309 = vmatprep.subr.mxu0 %v121
    %310 = vmatpush1.msra.mxu0 %v120
    %311 = vmatprep.subr.mxu0 %v125
    %312 = vmatpush1.msra.mxu0 %v124
    %313 = vmatprep.subr.mxu0 %v129
    %314 = vmatpush1.msra.mxu0 %v128
    %315 = vmatprep.subr.mxu0 %v133
    %316 = vmatpush1.msra.mxu0 %v132
    %317 = vmatprep.subr.mxu0 %v137
    %318 = vmatpush1.msra.mxu0 %v136
    %319 = vmatprep.subr.mxu0 %v141
    %320 = vmatpush1.msra.mxu0 %v140
    %321 = vmatprep.subr.mxu0 %v145
    %322 = vmatpush1.msra.mxu0 %v144
    %323 = vmatprep.subr.mxu0 %v149
    %324 = vmatpush1.msra.mxu0 %v148
    %325 = vmatprep.subr.mxu0 %v153
    %326 = vmatpush1.msra.mxu0 %v152
    %327 = vmatprep.subr.mxu0 %v157
    %328 = vmatpush1.msra.mxu0 %v156
    %329 = vmatprep.subr.mxu0 %v161
    %330 = vmatpush1.msra.mxu0 %v160
    %331 = vmatprep.subr.mxu0 %v165
    %332 = vmatpush1.msra.mxu0 %v164
    %333 = vmatprep.subr.mxu0 %v169
    %334 = vmatpush1.msra.mxu0 %v168
    %335 = vmatprep.subr.mxu0 %v173
    %336 = vmatpush1.msra.mxu0 %v172
    %337 = vmatprep.subr.mxu0 %v177
    %338 = vmatpush1.msra.mxu0 %v176
    %339 = vmatprep.subr.mxu0 %v181
    %340 = vmatpush1.msra.mxu0 %v180
    %341 = vmatprep.subr.mxu0 %v185
    %342 = vmatpush1.msra.mxu0 %v184
    %343 = vmatprep.mubr.f32.mxu0 %v57
    %344 = vmatmul.mubr.f32.gmra.mrb[0].mxu0 %v56
    %v345 = vpop.f32.mrb[0].mxu0
    %v346 = vadd.f32 %v199, %v345
    %v347 = vpop.f32.mrb[0].mxu0
    %v348 = vadd.f32 %v203, %v347
    %349 = vdwg.mxu0
    %vm350 = vcmp.gt.f32.partialorder %v275, 0.0
    %vm351 = vcmp.gt.f32.partialorder %v277, 0.0
    %vm352 = vcmp.gt.f32.partialorder %v346, 0.0
    %vm353 = vcmp.gt.f32.partialorder %v348, 0.0
    %v354 = vmul.f32 %v275, 0.2
    %v355 = vmul.f32 %v277, 0.2
    %v356 = vmul.f32 %v346, 0.2
    %v357 = vmul.f32 %v348, 0.2
    %v358 = vsel %vm350, %v275, %v354
    %v359 = vsel %vm351, %v277, %v355
    %v360 = vsel %vm352, %v346, %v356
    %v361 = vsel %vm353, %v348, %v357
    %v362 = vld [vmem:[#allocation2] sm:$0xff]
    %v363 = vld [vmem:[#allocation2 + $0x8] sm:$0xff]
    %v364 = vld [vmem:[#allocation2 + $0x10] sm:$0xff]
    %v365 = vld [vmem:[#allocation2 + $0x18] sm:$0xff]
    %v366 = vld [vmem:[#allocation2 + $0x20] sm:$0xff]
    %v367 = vld [vmem:[#allocation2 + $0x28] sm:$0xff]
    %v368 = vld [vmem:[#allocation2 + $0x30] sm:$0xff]
    %v369 = vld [vmem:[#allocation2 + $0x38] sm:$0xff]
    %v370 = vld [vmem:[#allocation2 + $0x40] sm:$0xff]
    %v371 = vld [vmem:[#allocation2 + $0x48] sm:$0xff]
    %v372 = vld [vmem:[#allocation2 + $0x50] sm:$0xff]
    %v373 = vld [vmem:[#allocation2 + $0x58] sm:$0xff]
    %v374 = vld [vmem:[#allocation2 + $0x60] sm:$0xff]
    %v375 = vld [vmem:[#allocation2 + $0x68] sm:$0xff]
    %v376 = vld [vmem:[#allocation2 + $0x70] sm:$0xff]
    %v377 = vld [vmem:[#allocation2 + $0x78] sm:$0xff]
    %v378 = vld [vmem:[#allocation2 + $0x80] sm:$0xff]
    %v379 = vld [vmem:[#allocation2 + $0x88] sm:$0xff]
    %v380 = vld [vmem:[#allocation2 + $0x90] sm:$0xff]
    %v381 = vld [vmem:[#allocation2 + $0x98] sm:$0xff]
    %v382 = vld [vmem:[#allocation2 + $0xa0] sm:$0xff]
    %v383 = vld [vmem:[#allocation2 + $0xa8] sm:$0xff]
    %v384 = vld [vmem:[#allocation2 + $0xb0] sm:$0xff]
    %v385 = vld [vmem:[#allocation2 + $0xb8] sm:$0xff]
    %v386 = vld [vmem:[#allocation2 + $0xc0] sm:$0xff]
    %v387 = vld [vmem:[#allocation2 + $0xc8] sm:$0xff]
    %v388 = vld [vmem:[#allocation2 + $0xd0] sm:$0xff]
    %v389 = vld [vmem:[#allocation2 + $0xd8] sm:$0xff]
    %v390 = vld [vmem:[#allocation2 + $0xe0] sm:$0xff]
    %v391 = vld [vmem:[#allocation2 + $0xe8] sm:$0xff]
    %v392 = vld [vmem:[#allocation2 + $0xf0] sm:$0xff]
    %v393 = vld [vmem:[#allocation2 + $0xf8] sm:$0xff]
    %v394 = vld [vmem:[#allocation2 + $0x100] sm:$0xff]
    %v395 = vld [vmem:[#allocation2 + $0x108] sm:$0xff]
    %v396 = vld [vmem:[#allocation2 + $0x110] sm:$0xff]
    %v397 = vld [vmem:[#allocation2 + $0x118] sm:$0xff]
    %v398 = vld [vmem:[#allocation2 + $0x120] sm:$0xff]
    %v399 = vld [vmem:[#allocation2 + $0x128] sm:$0xff]
    %v400 = vld [vmem:[#allocation2 + $0x130] sm:$0xff]
    %v401 = vld [vmem:[#allocation2 + $0x138] sm:$0xff]
    %v402 = vld [vmem:[#allocation2 + $0x140] sm:$0xff]
    %v403 = vld [vmem:[#allocation2 + $0x148] sm:$0xff]
    %v404 = vld [vmem:[#allocation2 + $0x150] sm:$0xff]
    %v405 = vld [vmem:[#allocation2 + $0x158] sm:$0xff]
    %v406 = vld [vmem:[#allocation2 + $0x160] sm:$0xff]
    %v407 = vld [vmem:[#allocation2 + $0x168] sm:$0xff]
    %v408 = vld [vmem:[#allocation2 + $0x170] sm:$0xff]
    %v409 = vld [vmem:[#allocation2 + $0x178] sm:$0xff]
    %v410 = vld [vmem:[#allocation2 + $0x180] sm:$0xff]
    %v411 = vld [vmem:[#allocation2 + $0x188] sm:$0xff]
    %v412 = vld [vmem:[#allocation2 + $0x190] sm:$0xff]
    %v413 = vld [vmem:[#allocation2 + $0x198] sm:$0xff]
    %v414 = vld [vmem:[#allocation2 + $0x1a0] sm:$0xff]
    %v415 = vld [vmem:[#allocation2 + $0x1a8] sm:$0xff]
    %v416 = vld [vmem:[#allocation2 + $0x1b0] sm:$0xff]
    %v417 = vld [vmem:[#allocation2 + $0x1b8] sm:$0xff]
    %v418 = vld [vmem:[#allocation2 + $0x1c0] sm:$0xff]
    %v419 = vld [vmem:[#allocation2 + $0x1c8] sm:$0xff]
    %v420 = vld [vmem:[#allocation2 + $0x1d0] sm:$0xff]
    %v421 = vld [vmem:[#allocation2 + $0x1d8] sm:$0xff]
    %v422 = vld [vmem:[#allocation2 + $0x1e0] sm:$0xff]
    %v423 = vld [vmem:[#allocation2 + $0x1e8] sm:$0xff]
    %v424 = vld [vmem:[#allocation2 + $0x1f0] sm:$0xff]
    %v425 = vld [vmem:[#allocation2 + $0x1f8] sm:$0xff]
    %v426 = vld [vmem:[#allocation2 + $0x200] sm:$0xff]
    %v427 = vld [vmem:[#allocation2 + $0x208] sm:$0xff]
    %v428 = vld [vmem:[#allocation2 + $0x210] sm:$0xff]
    %v429 = vld [vmem:[#allocation2 + $0x218] sm:$0xff]
    %v430 = vld [vmem:[#allocation2 + $0x220] sm:$0xff]
    %v431 = vld [vmem:[#allocation2 + $0x228] sm:$0xff]
    %v432 = vld [vmem:[#allocation2 + $0x230] sm:$0xff]
    %v433 = vld [vmem:[#allocation2 + $0x238] sm:$0xff]
    %v434 = vld [vmem:[#allocation2 + $0x240] sm:$0xff]
    %v435 = vld [vmem:[#allocation2 + $0x248] sm:$0xff]
    %v436 = vld [vmem:[#allocation2 + $0x250] sm:$0xff]
    %v437 = vld [vmem:[#allocation2 + $0x258] sm:$0xff]
    %v438 = vld [vmem:[#allocation2 + $0x260] sm:$0xff]
    %v439 = vld [vmem:[#allocation2 + $0x268] sm:$0xff]
    %v440 = vld [vmem:[#allocation2 + $0x270] sm:$0xff]
    %v441 = vld [vmem:[#allocation2 + $0x278] sm:$0xff]
    %v442 = vld [vmem:[#allocation2 + $0x280] sm:$0xff]
    %v443 = vld [vmem:[#allocation2 + $0x288] sm:$0xff]
    %v444 = vld [vmem:[#allocation2 + $0x290] sm:$0xff]
    %v445 = vld [vmem:[#allocation2 + $0x298] sm:$0xff]
    %v446 = vld [vmem:[#allocation2 + $0x2a0] sm:$0xff]
    %v447 = vld [vmem:[#allocation2 + $0x2a8] sm:$0xff]
    %v448 = vld [vmem:[#allocation2 + $0x2b0] sm:$0xff]
    %v449 = vld [vmem:[#allocation2 + $0x2b8] sm:$0xff]
    %v450 = vld [vmem:[#allocation2 + $0x2c0] sm:$0xff]
    %v451 = vld [vmem:[#allocation2 + $0x2c8] sm:$0xff]
    %v452 = vld [vmem:[#allocation2 + $0x2d0] sm:$0xff]
    %v453 = vld [vmem:[#allocation2 + $0x2d8] sm:$0xff]
    %v454 = vld [vmem:[#allocation2 + $0x2e0] sm:$0xff]
    %v455 = vld [vmem:[#allocation2 + $0x2e8] sm:$0xff]
    %v456 = vld [vmem:[#allocation2 + $0x2f0] sm:$0xff]
    %v457 = vld [vmem:[#allocation2 + $0x2f8] sm:$0xff]
    %v458 = vld [vmem:[#allocation2 + $0x300] sm:$0xff]
    %v459 = vld [vmem:[#allocation2 + $0x308] sm:$0xff]
    %v460 = vld [vmem:[#allocation2 + $0x310] sm:$0xff]
    %v461 = vld [vmem:[#allocation2 + $0x318] sm:$0xff]
    %v462 = vld [vmem:[#allocation2 + $0x320] sm:$0xff]
    %v463 = vld [vmem:[#allocation2 + $0x328] sm:$0xff]
    %v464 = vld [vmem:[#allocation2 + $0x330] sm:$0xff]
    %v465 = vld [vmem:[#allocation2 + $0x338] sm:$0xff]
    %v466 = vld [vmem:[#allocation2 + $0x340] sm:$0xff]
    %v467 = vld [vmem:[#allocation2 + $0x348] sm:$0xff]
    %v468 = vld [vmem:[#allocation2 + $0x350] sm:$0xff]
    %v469 = vld [vmem:[#allocation2 + $0x358] sm:$0xff]
    %v470 = vld [vmem:[#allocation2 + $0x360] sm:$0xff]
    %v471 = vld [vmem:[#allocation2 + $0x368] sm:$0xff]
    %v472 = vld [vmem:[#allocation2 + $0x370] sm:$0xff]
    %v473 = vld [vmem:[#allocation2 + $0x378] sm:$0xff]
    %v474 = vld [vmem:[#allocation2 + $0x380] sm:$0xff]
    %v475 = vld [vmem:[#allocation2 + $0x388] sm:$0xff]
    %v476 = vld [vmem:[#allocation2 + $0x390] sm:$0xff]
    %v477 = vld [vmem:[#allocation2 + $0x398] sm:$0xff]
    %v478 = vld [vmem:[#allocation2 + $0x3a0] sm:$0xff]
    %v479 = vld [vmem:[#allocation2 + $0x3a8] sm:$0xff]
    %v480 = vld [vmem:[#allocation2 + $0x3b0] sm:$0xff]
    %v481 = vld [vmem:[#allocation2 + $0x3b8] sm:$0xff]
    %v482 = vld [vmem:[#allocation2 + $0x3c0] sm:$0xff]
    %v483 = vld [vmem:[#allocation2 + $0x3c8] sm:$0xff]
    %v484 = vld [vmem:[#allocation2 + $0x3d0] sm:$0xff]
    %v485 = vld [vmem:[#allocation2 + $0x3d8] sm:$0xff]
    %v486 = vld [vmem:[#allocation2 + $0x3e0] sm:$0xff]
    %v487 = vld [vmem:[#allocation2 + $0x3e8] sm:$0xff]
    %v488 = vld [vmem:[#allocation2 + $0x3f0] sm:$0xff]
    %v489 = vld [vmem:[#allocation2 + $0x3f8] sm:$0xff]
    %v490 = vld [vmem:[#allocation2 + $0x400] sm:$0xff]
    %v491 = vld [vmem:[#allocation2 + $0x408] sm:$0xff]
    %v492 = vld [vmem:[#allocation2 + $0x410] sm:$0xff]
    %v493 = vld [vmem:[#allocation2 + $0x418] sm:$0xff]
    %v494 = vld [vmem:[#allocation2 + $0x420] sm:$0xff]
    %v495 = vld [vmem:[#allocation2 + $0x428] sm:$0xff]
    %v496 = vld [vmem:[#allocation2 + $0x430] sm:$0xff]
    %v497 = vld [vmem:[#allocation2 + $0x438] sm:$0xff]
    %v498 = vld [vmem:[#allocation2 + $0x440] sm:$0xff]
    %v499 = vld [vmem:[#allocation2 + $0x448] sm:$0xff]
    %v500 = vld [vmem:[#allocation2 + $0x450] sm:$0xff]
    %v501 = vld [vmem:[#allocation2 + $0x458] sm:$0xff]
    %v502 = vld [vmem:[#allocation2 + $0x460] sm:$0xff]
    %v503 = vld [vmem:[#allocation2 + $0x468] sm:$0xff]
    %v504 = vld [vmem:[#allocation2 + $0x470] sm:$0xff]
    %v505 = vld [vmem:[#allocation2 + $0x478] sm:$0xff]
    %v506 = vld [vmem:[#allocation2 + $0x480] sm:$0xff]
    %v507 = vld [vmem:[#allocation2 + $0x488] sm:$0xff]
    %v508 = vld [vmem:[#allocation2 + $0x490] sm:$0xff]
    %v509 = vld [vmem:[#allocation2 + $0x498] sm:$0xff]
    %v510 = vld [vmem:[#allocation2 + $0x4a0] sm:$0xff]
    %v511 = vld [vmem:[#allocation2 + $0x4a8] sm:$0xff]
    %v512 = vld [vmem:[#allocation2 + $0x4b0] sm:$0xff]
    %v513 = vld [vmem:[#allocation2 + $0x4b8] sm:$0xff]
    %v514 = vld [vmem:[#allocation2 + $0x4c0] sm:$0xff]
    %v515 = vld [vmem:[#allocation2 + $0x4c8] sm:$0xff]
    %v516 = vld [vmem:[#allocation2 + $0x4d0] sm:$0xff]
    %v517 = vld [vmem:[#allocation2 + $0x4d8] sm:$0xff]
    %v518 = vld [vmem:[#allocation2 + $0x4e0] sm:$0xff]
    %v519 = vld [vmem:[#allocation2 + $0x4e8] sm:$0xff]
    %v520 = vld [vmem:[#allocation2 + $0x4f0] sm:$0xff]
    %v521 = vld [vmem:[#allocation2 + $0x4f8] sm:$0xff]
    %v522 = vld [vmem:[#allocation2 + $0x500] sm:$0xff]
    %v523 = vld [vmem:[#allocation2 + $0x508] sm:$0xff]
    %v524 = vld [vmem:[#allocation2 + $0x510] sm:$0xff]
    %v525 = vld [vmem:[#allocation2 + $0x518] sm:$0xff]
    %v526 = vld [vmem:[#allocation2 + $0x520] sm:$0xff]
    %v527 = vld [vmem:[#allocation2 + $0x528] sm:$0xff]
    %v528 = vld [vmem:[#allocation2 + $0x530] sm:$0xff]
    %v529 = vld [vmem:[#allocation2 + $0x538] sm:$0xff]
    %v530 = vld [vmem:[#allocation2 + $0x540] sm:$0xff]
    %v531 = vld [vmem:[#allocation2 + $0x548] sm:$0xff]
    %v532 = vld [vmem:[#allocation2 + $0x550] sm:$0xff]
    %v533 = vld [vmem:[#allocation2 + $0x558] sm:$0xff]
    %v534 = vld [vmem:[#allocation2 + $0x560] sm:$0xff]
    %v535 = vld [vmem:[#allocation2 + $0x568] sm:$0xff]
    %v536 = vld [vmem:[#allocation2 + $0x570] sm:$0xff]
    %v537 = vld [vmem:[#allocation2 + $0x578] sm:$0xff]
    %v538 = vld [vmem:[#allocation2 + $0x580] sm:$0xff]
    %v539 = vld [vmem:[#allocation2 + $0x588] sm:$0xff]
    %v540 = vld [vmem:[#allocation2 + $0x590] sm:$0xff]
    %v541 = vld [vmem:[#allocation2 + $0x598] sm:$0xff]
    %v542 = vld [vmem:[#allocation2 + $0x5a0] sm:$0xff]
    %v543 = vld [vmem:[#allocation2 + $0x5a8] sm:$0xff]
    %v544 = vld [vmem:[#allocation2 + $0x5b0] sm:$0xff]
    %v545 = vld [vmem:[#allocation2 + $0x5b8] sm:$0xff]
    %v546 = vld [vmem:[#allocation2 + $0x5c0] sm:$0xff]
    %v547 = vld [vmem:[#allocation2 + $0x5c8] sm:$0xff]
    %v548 = vld [vmem:[#allocation2 + $0x5d0] sm:$0xff]
    %v549 = vld [vmem:[#allocation2 + $0x5d8] sm:$0xff]
    %v550 = vld [vmem:[#allocation2 + $0x5e0] sm:$0xff]
    %v551 = vld [vmem:[#allocation2 + $0x5e8] sm:$0xff]
    %v552 = vld [vmem:[#allocation2 + $0x5f0] sm:$0xff]
    %v553 = vld [vmem:[#allocation2 + $0x5f8] sm:$0xff]
    %v554 = vld [vmem:[#allocation2 + $0x600] sm:$0xff]
    %v555 = vld [vmem:[#allocation2 + $0x608] sm:$0xff]
    %v556 = vld [vmem:[#allocation2 + $0x610] sm:$0xff]
    %v557 = vld [vmem:[#allocation2 + $0x618] sm:$0xff]
    %v558 = vld [vmem:[#allocation2 + $0x620] sm:$0xff]
    %v559 = vld [vmem:[#allocation2 + $0x628] sm:$0xff]
    %v560 = vld [vmem:[#allocation2 + $0x630] sm:$0xff]
    %v561 = vld [vmem:[#allocation2 + $0x638] sm:$0xff]
    %v562 = vld [vmem:[#allocation2 + $0x640] sm:$0xff]
    %v563 = vld [vmem:[#allocation2 + $0x648] sm:$0xff]
    %v564 = vld [vmem:[#allocation2 + $0x650] sm:$0xff]
    %v565 = vld [vmem:[#allocation2 + $0x658] sm:$0xff]
    %v566 = vld [vmem:[#allocation2 + $0x660] sm:$0xff]
    %v567 = vld [vmem:[#allocation2 + $0x668] sm:$0xff]
    %v568 = vld [vmem:[#allocation2 + $0x670] sm:$0xff]
    %v569 = vld [vmem:[#allocation2 + $0x678] sm:$0xff]
    %v570 = vld [vmem:[#allocation2 + $0x680] sm:$0xff]
    %v571 = vld [vmem:[#allocation2 + $0x688] sm:$0xff]
    %v572 = vld [vmem:[#allocation2 + $0x690] sm:$0xff]
    %v573 = vld [vmem:[#allocation2 + $0x698] sm:$0xff]
    %v574 = vld [vmem:[#allocation2 + $0x6a0] sm:$0xff]
    %v575 = vld [vmem:[#allocation2 + $0x6a8] sm:$0xff]
    %v576 = vld [vmem:[#allocation2 + $0x6b0] sm:$0xff]
    %v577 = vld [vmem:[#allocation2 + $0x6b8] sm:$0xff]
    %v578 = vld [vmem:[#allocation2 + $0x6c0] sm:$0xff]
    %v579 = vld [vmem:[#allocation2 + $0x6c8] sm:$0xff]
    %v580 = vld [vmem:[#allocation2 + $0x6d0] sm:$0xff]
    %v581 = vld [vmem:[#allocation2 + $0x6d8] sm:$0xff]
    %v582 = vld [vmem:[#allocation2 + $0x6e0] sm:$0xff]
    %v583 = vld [vmem:[#allocation2 + $0x6e8] sm:$0xff]
    %v584 = vld [vmem:[#allocation2 + $0x6f0] sm:$0xff]
    %v585 = vld [vmem:[#allocation2 + $0x6f8] sm:$0xff]
    %v586 = vld [vmem:[#allocation2 + $0x700] sm:$0xff]
    %v587 = vld [vmem:[#allocation2 + $0x708] sm:$0xff]
    %v588 = vld [vmem:[#allocation2 + $0x710] sm:$0xff]
    %v589 = vld [vmem:[#allocation2 + $0x718] sm:$0xff]
    %v590 = vld [vmem:[#allocation2 + $0x720] sm:$0xff]
    %v591 = vld [vmem:[#allocation2 + $0x728] sm:$0xff]
    %v592 = vld [vmem:[#allocation2 + $0x730] sm:$0xff]
    %v593 = vld [vmem:[#allocation2 + $0x738] sm:$0xff]
    %v594 = vld [vmem:[#allocation2 + $0x740] sm:$0xff]
    %v595 = vld [vmem:[#allocation2 + $0x748] sm:$0xff]
    %v596 = vld [vmem:[#allocation2 + $0x750] sm:$0xff]
    %v597 = vld [vmem:[#allocation2 + $0x758] sm:$0xff]
    %v598 = vld [vmem:[#allocation2 + $0x760] sm:$0xff]
    %v599 = vld [vmem:[#allocation2 + $0x768] sm:$0xff]
    %v600 = vld [vmem:[#allocation2 + $0x770] sm:$0xff]
    %v601 = vld [vmem:[#allocation2 + $0x778] sm:$0xff]
    %v602 = vld [vmem:[#allocation2 + $0x780] sm:$0xff]
    %v603 = vld [vmem:[#allocation2 + $0x788] sm:$0xff]
    %v604 = vld [vmem:[#allocation2 + $0x790] sm:$0xff]
    %v605 = vld [vmem:[#allocation2 + $0x798] sm:$0xff]
    %v606 = vld [vmem:[#allocation2 + $0x7a0] sm:$0xff]
    %v607 = vld [vmem:[#allocation2 + $0x7a8] sm:$0xff]
    %v608 = vld [vmem:[#allocation2 + $0x7b0] sm:$0xff]
    %v609 = vld [vmem:[#allocation2 + $0x7b8] sm:$0xff]
    %v610 = vld [vmem:[#allocation2 + $0x7c0] sm:$0xff]
    %v611 = vld [vmem:[#allocation2 + $0x7c8] sm:$0xff]
    %v612 = vld [vmem:[#allocation2 + $0x7d0] sm:$0xff]
    %v613 = vld [vmem:[#allocation2 + $0x7d8] sm:$0xff]
    %v614 = vld [vmem:[#allocation2 + $0x7e0] sm:$0xff]
    %v615 = vld [vmem:[#allocation2 + $0x7e8] sm:$0xff]
    %v616 = vld [vmem:[#allocation2 + $0x7f0] sm:$0xff]
    %v617 = vld [vmem:[#allocation2 + $0x7f8] sm:$0xff]
    %v618 = vld [vmem:[%s5] sm:$0xf]
    %v620 = vlaneseq
    %v621 = vshrl.u32 %v620, 7
    %v622 = vsub.s32 0, %v621
    %v623 = vrot.slane %v618, %v622
    %v624 = vlaneseq
    %v625 = vshrl.u32 %v624, 7
    %v626 = vsub.s32 1, %v625
    %v627 = vrot.slane %v618, %v626
    %v628 = vlaneseq
    %v629 = vshrl.u32 %v628, 7
    %v630 = vsub.s32 2, %v629
    %v631 = vrot.slane %v618, %v630
    %v632 = vlaneseq
    %v633 = vshrl.u32 %v632, 7
    %v634 = vsub.s32 3, %v633
    %v635 = vrot.slane %v618, %v634
    %640 = vmatprep.subr.mxu0 %v363
    %641 = vmatpush1.msra.mxu0 %v362
    %642 = vmatprep.subr.mxu0 %v367
    %643 = vmatpush1.msra.mxu0 %v366
    %644 = vmatprep.subr.mxu0 %v371
    %645 = vmatpush1.msra.mxu0 %v370
    %646 = vmatprep.subr.mxu0 %v375
    %647 = vmatpush1.msra.mxu0 %v374
    %648 = vmatprep.subr.mxu0 %v379
    %649 = vmatpush1.msra.mxu0 %v378
    %650 = vmatprep.subr.mxu0 %v383
    %651 = vmatpush1.msra.mxu0 %v382
    %652 = vmatprep.subr.mxu0 %v387
    %653 = vmatpush1.msra.mxu0 %v386
    %654 = vmatprep.subr.mxu0 %v391
    %655 = vmatpush1.msra.mxu0 %v390
    %656 = vmatprep.subr.mxu0 %v395
    %657 = vmatpush1.msra.mxu0 %v394
    %658 = vmatprep.subr.mxu0 %v399
    %659 = vmatpush1.msra.mxu0 %v398
    %660 = vmatprep.subr.mxu0 %v403
    %661 = vmatpush1.msra.mxu0 %v402
    %662 = vmatprep.subr.mxu0 %v407
    %663 = vmatpush1.msra.mxu0 %v406
    %664 = vmatprep.subr.mxu0 %v411
    %665 = vmatpush1.msra.mxu0 %v410
    %666 = vmatprep.subr.mxu0 %v415
    %667 = vmatpush1.msra.mxu0 %v414
    %668 = vmatprep.subr.mxu0 %v419
    %669 = vmatpush1.msra.mxu0 %v418
    %670 = vmatprep.subr.mxu0 %v423
    %671 = vmatpush1.msra.mxu0 %v422
    %672 = vmatprep.subr.mxu0 %v427
    %673 = vmatpush1.msra.mxu0 %v426
    %674 = vmatprep.subr.mxu0 %v431
    %675 = vmatpush1.msra.mxu0 %v430
    %676 = vmatprep.subr.mxu0 %v435
    %677 = vmatpush1.msra.mxu0 %v434
    %678 = vmatprep.subr.mxu0 %v439
    %679 = vmatpush1.msra.mxu0 %v438
    %680 = vmatprep.subr.mxu0 %v443
    %681 = vmatpush1.msra.mxu0 %v442
    %682 = vmatprep.subr.mxu0 %v447
    %683 = vmatpush1.msra.mxu0 %v446
    %684 = vmatprep.subr.mxu0 %v451
    %685 = vmatpush1.msra.mxu0 %v450
    %686 = vmatprep.subr.mxu0 %v455
    %687 = vmatpush1.msra.mxu0 %v454
    %688 = vmatprep.subr.mxu0 %v459
    %689 = vmatpush1.msra.mxu0 %v458
    %690 = vmatprep.subr.mxu0 %v463
    %691 = vmatpush1.msra.mxu0 %v462
    %692 = vmatprep.subr.mxu0 %v467
    %693 = vmatpush1.msra.mxu0 %v466
    %694 = vmatprep.subr.mxu0 %v471
    %695 = vmatpush1.msra.mxu0 %v470
    %696 = vmatprep.subr.mxu0 %v475
    %697 = vmatpush1.msra.mxu0 %v474
    %698 = vmatprep.subr.mxu0 %v479
    %699 = vmatpush1.msra.mxu0 %v478
    %700 = vmatprep.subr.mxu0 %v483
    %701 = vmatpush1.msra.mxu0 %v482
    %702 = vmatprep.subr.mxu0 %v487
    %703 = vmatpush1.msra.mxu0 %v486
    %704 = vmatprep.mubr.f32.mxu0 %v359
    %705 = vmatmul.mubr.f32.gmra.mrb[0].mxu0 %v358
    %v706 = vpop.f32.mrb[0].mxu0
    %v707 = vadd.f32 %v623, %v706
    %v708 = vpop.f32.mrb[0].mxu0
    %v709 = vadd.f32 %v627, %v708
    %710 = vdwg.mxu0
    %711 = vmatprep.subr.mxu0 %v491
    %712 = vmatpush1.msra.mxu0 %v490
    %713 = vmatprep.subr.mxu0 %v495
    %714 = vmatpush1.msra.mxu0 %v494
    %715 = vmatprep.subr.mxu0 %v499
    %716 = vmatpush1.msra.mxu0 %v498
    %717 = vmatprep.subr.mxu0 %v503
    %718 = vmatpush1.msra.mxu0 %v502
    %719 = vmatprep.subr.mxu0 %v507
    %720 = vmatpush1.msra.mxu0 %v506
    %721 = vmatprep.subr.mxu0 %v511
    %722 = vmatpush1.msra.mxu0 %v510
    %723 = vmatprep.subr.mxu0 %v515
    %724 = vmatpush1.msra.mxu0 %v514
    %725 = vmatprep.subr.mxu0 %v519
    %726 = vmatpush1.msra.mxu0 %v518
    %727 = vmatprep.subr.mxu0 %v523
    %728 = vmatpush1.msra.mxu0 %v522
    %729 = vmatprep.subr.mxu0 %v527
    %730 = vmatpush1.msra.mxu0 %v526
    %731 = vmatprep.subr.mxu0 %v531
    %732 = vmatpush1.msra.mxu0 %v530
    %733 = vmatprep.subr.mxu0 %v535
    %734 = vmatpush1.msra.mxu0 %v534
    %735 = vmatprep.subr.mxu0 %v539
    %736 = vmatpush1.msra.mxu0 %v538
    %737 = vmatprep.subr.mxu0 %v543
    %738 = vmatpush1.msra.mxu0 %v542
    %739 = vmatprep.subr.mxu0 %v547
    %740 = vmatpush1.msra.mxu0 %v546
    %741 = vmatprep.subr.mxu0 %v551
    %742 = vmatpush1.msra.mxu0 %v550
    %743 = vmatprep.subr.mxu0 %v555
    %744 = vmatpush1.msra.mxu0 %v554
    %745 = vmatprep.subr.mxu0 %v559
    %746 = vmatpush1.msra.mxu0 %v558
    %747 = vmatprep.subr.mxu0 %v563
    %748 = vmatpush1.msra.mxu0 %v562
    %749 = vmatprep.subr.mxu0 %v567
    %750 = vmatpush1.msra.mxu0 %v566
    %751 = vmatprep.subr.mxu0 %v571
    %752 = vmatpush1.msra.mxu0 %v570
    %753 = vmatprep.subr.mxu0 %v575
    %754 = vmatpush1.msra.mxu0 %v574
    %755 = vmatprep.subr.mxu0 %v579
    %756 = vmatpush1.msra.mxu0 %v578
    %757 = vmatprep.subr.mxu0 %v583
    %758 = vmatpush1.msra.mxu0 %v582
    %759 = vmatprep.subr.mxu0 %v587
    %760 = vmatpush1.msra.mxu0 %v586
    %761 = vmatprep.subr.mxu0 %v591
    %762 = vmatpush1.msra.mxu0 %v590
    %763 = vmatprep.subr.mxu0 %v595
    %764 = vmatpush1.msra.mxu0 %v594
    %765 = vmatprep.subr.mxu0 %v599
    %766 = vmatpush1.msra.mxu0 %v598
    %767 = vmatprep.subr.mxu0 %v603
    %768 = vmatpush1.msra.mxu0 %v602
    %769 = vmatprep.subr.mxu0 %v607
    %770 = vmatpush1.msra.mxu0 %v606
    %771 = vmatprep.subr.mxu0 %v611
    %772 = vmatpush1.msra.mxu0 %v610
    %773 = vmatprep.subr.mxu0 %v615
    %774 = vmatpush1.msra.mxu0 %v614
    %775 = vmatprep.mubr.f32.mxu0 %v361
    %776 = vmatmul.mubr.f32.gmra.mrb[0].mxu0 %v360
    %v777 = vpop.f32.mrb[0].mxu0
    %v778 = vadd.f32 %v707, %v777
    %v779 = vpop.f32.mrb[0].mxu0
    %v780 = vadd.f32 %v709, %v779
    %781 = vdwg.mxu0
    %782 = vmatprep.subr.mxu0 %v365
    %783 = vmatpush1.msra.mxu0 %v364
    %784 = vmatprep.subr.mxu0 %v369
    %785 = vmatpush1.msra.mxu0 %v368
    %786 = vmatprep.subr.mxu0 %v373
    %787 = vmatpush1.msra.mxu0 %v372
    %788 = vmatprep.subr.mxu0 %v377
    %789 = vmatpush1.msra.mxu0 %v376
    %790 = vmatprep.subr.mxu0 %v381
    %791 = vmatpush1.msra.mxu0 %v380
    %792 = vmatprep.subr.mxu0 %v385
    %793 = vmatpush1.msra.mxu0 %v384
    %794 = vmatprep.subr.mxu0 %v389
    %795 = vmatpush1.msra.mxu0 %v388
    %796 = vmatprep.subr.mxu0 %v393
    %797 = vmatpush1.msra.mxu0 %v392
    %798 = vmatprep.subr.mxu0 %v397
    %799 = vmatpush1.msra.mxu0 %v396
    %800 = vmatprep.subr.mxu0 %v401
    %801 = vmatpush1.msra.mxu0 %v400
    %802 = vmatprep.subr.mxu0 %v405
    %803 = vmatpush1.msra.mxu0 %v404
    %804 = vmatprep.subr.mxu0 %v409
    %805 = vmatpush1.msra.mxu0 %v408
    %806 = vmatprep.subr.mxu0 %v413
    %807 = vmatpush1.msra.mxu0 %v412
    %808 = vmatprep.subr.mxu0 %v417
    %809 = vmatpush1.msra.mxu0 %v416
    %810 = vmatprep.subr.mxu0 %v421
    %811 = vmatpush1.msra.mxu0 %v420
    %812 = vmatprep.subr.mxu0 %v425
    %813 = vmatpush1.msra.mxu0 %v424
    %814 = vmatprep.subr.mxu0 %v429
    %815 = vmatpush1.msra.mxu0 %v428
    %816 = vmatprep.subr.mxu0 %v433
    %817 = vmatpush1.msra.mxu0 %v432
    %818 = vmatprep.subr.mxu0 %v437
    %819 = vmatpush1.msra.mxu0 %v436
    %820 = vmatprep.subr.mxu0 %v441
    %821 = vmatpush1.msra.mxu0 %v440
    %822 = vmatprep.subr.mxu0 %v445
    %823 = vmatpush1.msra.mxu0 %v444
    %824 = vmatprep.subr.mxu0 %v449
    %825 = vmatpush1.msra.mxu0 %v448
    %826 = vmatprep.subr.mxu0 %v453
    %827 = vmatpush1.msra.mxu0 %v452
    %828 = vmatprep.subr.mxu0 %v457
    %829 = vmatpush1.msra.mxu0 %v456
    %830 = vmatprep.subr.mxu0 %v461
    %831 = vmatpush1.msra.mxu0 %v460
    %832 = vmatprep.subr.mxu0 %v465
    %833 = vmatpush1.msra.mxu0 %v464
    %834 = vmatprep.subr.mxu0 %v469
    %835 = vmatpush1.msra.mxu0 %v468
    %836 = vmatprep.subr.mxu0 %v473
    %837 = vmatpush1.msra.mxu0 %v472
    %838 = vmatprep.subr.mxu0 %v477
    %839 = vmatpush1.msra.mxu0 %v476
    %840 = vmatprep.subr.mxu0 %v481
    %841 = vmatpush1.msra.mxu0 %v480
    %842 = vmatprep.subr.mxu0 %v485
    %843 = vmatpush1.msra.mxu0 %v484
    %844 = vmatprep.subr.mxu0 %v489
    %845 = vmatpush1.msra.mxu0 %v488
    %846 = vmatprep.mubr.f32.mxu0 %v359
    %847 = vmatmul.mubr.f32.gmra.mrb[0].mxu0 %v358
    %v848 = vpop.f32.mrb[0].mxu0
    %v849 = vadd.f32 %v631, %v848
    %v850 = vpop.f32.mrb[0].mxu0
    %v851 = vadd.f32 %v635, %v850
    %852 = vdwg.mxu0
    %853 = vmatprep.subr.mxu0 %v493
    %854 = vmatpush1.msra.mxu0 %v492
    %855 = vmatprep.subr.mxu0 %v497
    %856 = vmatpush1.msra.mxu0 %v496
    %857 = vmatprep.subr.mxu0 %v501
    %858 = vmatpush1.msra.mxu0 %v500
    %859 = vmatprep.subr.mxu0 %v505
    %860 = vmatpush1.msra.mxu0 %v504
    %861 = vmatprep.subr.mxu0 %v509
    %862 = vmatpush1.msra.mxu0 %v508
    %863 = vmatprep.subr.mxu0 %v513
    %864 = vmatpush1.msra.mxu0 %v512
    %865 = vmatprep.subr.mxu0 %v517
    %866 = vmatpush1.msra.mxu0 %v516
    %867 = vmatprep.subr.mxu0 %v521
    %868 = vmatpush1.msra.mxu0 %v520
    %869 = vmatprep.subr.mxu0 %v525
    %870 = vmatpush1.msra.mxu0 %v524
    %871 = vmatprep.subr.mxu0 %v529
    %872 = vmatpush1.msra.mxu0 %v528
    %873 = vmatprep.subr.mxu0 %v533
    %874 = vmatpush1.msra.mxu0 %v532
    %875 = vmatprep.subr.mxu0 %v537
    %876 = vmatpush1.msra.mxu0 %v536
    %877 = vmatprep.subr.mxu0 %v541
    %878 = vmatpush1.msra.mxu0 %v540
    %879 = vmatprep.subr.mxu0 %v545
    %880 = vmatpush1.msra.mxu0 %v544
    %881 = vmatprep.subr.mxu0 %v549
    %882 = vmatpush1.msra.mxu0 %v548
    %883 = vmatprep.subr.mxu0 %v553
    %884 = vmatpush1.msra.mxu0 %v552
    %885 = vmatprep.subr.mxu0 %v557
    %886 = vmatpush1.msra.mxu0 %v556
    %887 = vmatprep.subr.mxu0 %v561
    %888 = vmatpush1.msra.mxu0 %v560
    %889 = vmatprep.subr.mxu0 %v565
    %890 = vmatpush1.msra.mxu0 %v564
    %891 = vmatprep.subr.mxu0 %v569
    %892 = vmatpush1.msra.mxu0 %v568
    %893 = vmatprep.subr.mxu0 %v573
    %894 = vmatpush1.msra.mxu0 %v572
    %895 = vmatprep.subr.mxu0 %v577
    %896 = vmatpush1.msra.mxu0 %v576
    %897 = vmatprep.subr.mxu0 %v581
    %898 = vmatpush1.msra.mxu0 %v580
    %899 = vmatprep.subr.mxu0 %v585
    %900 = vmatpush1.msra.mxu0 %v584
    %901 = vmatprep.subr.mxu0 %v589
    %902 = vmatpush1.msra.mxu0 %v588
    %903 = vmatprep.subr.mxu0 %v593
    %904 = vmatpush1.msra.mxu0 %v592
    %905 = vmatprep.subr.mxu0 %v597
    %906 = vmatpush1.msra.mxu0 %v596
    %907 = vmatprep.subr.mxu0 %v601
    %908 = vmatpush1.msra.mxu0 %v600
    %909 = vmatprep.subr.mxu0 %v605
    %910 = vmatpush1.msra.mxu0 %v604
    %911 = vmatprep.subr.mxu0 %v609
    %912 = vmatpush1.msra.mxu0 %v608
    %913 = vmatprep.subr.mxu0 %v613
    %914 = vmatpush1.msra.mxu0 %v612
    %915 = vmatprep.subr.mxu0 %v617
    %916 = vmatpush1.msra.mxu0 %v616
    %917 = vmatprep.mubr.f32.mxu0 %v361
    %918 = vmatmul.mubr.f32.gmra.mrb[0].mxu0 %v360
    %v919 = vpop.f32.mrb[0].mxu0
    %v920 = vadd.f32 %v849, %v919
    %v921 = vpop.f32.mrb[0].mxu0
    %v922 = vadd.f32 %v851, %v921
    %923 = vdwg.mxu0
    %v924 = vld [vmem:[%s6] sm:$0xf]
    %v926 = vlaneseq
    %v927 = vshrl.u32 %v926, 7
    %v928 = vsub.s32 0, %v927
    %v929 = vrot.slane %v924, %v928
    %v930 = vlaneseq
    %v931 = vshrl.u32 %v930, 7
    %v932 = vsub.s32 1, %v931
    %v933 = vrot.slane %v924, %v932
    %v934 = vlaneseq
    %v935 = vshrl.u32 %v934, 7
    %v936 = vsub.s32 2, %v935
    %v937 = vrot.slane %v924, %v936
    %v938 = vlaneseq
    %v939 = vshrl.u32 %v938, 7
    %v940 = vsub.s32 3, %v939
    %v941 = vrot.slane %v924, %v940
    %v946 = vmul.f32 %v778, %v929
    %v947 = vmul.f32 %v780, %v933
    %v948 = vmul.f32 %v920, %v937
    %v949 = vmul.f32 %v922, %v941
    %v950 = vld [vmem:[%s7] sm:$0xf]
    %v952 = vlaneseq
    %v953 = vshrl.u32 %v952, 7
    %v954 = vsub.s32 0, %v953
    %v955 = vrot.slane %v950, %v954
    %v956 = vlaneseq
    %v957 = vshrl.u32 %v956, 7
    %v958 = vsub.s32 1, %v957
    %v959 = vrot.slane %v950, %v958
    %v960 = vlaneseq
    %v961 = vshrl.u32 %v960, 7
    %v962 = vsub.s32 2, %v961
    %v963 = vrot.slane %v950, %v962
    %v964 = vlaneseq
    %v965 = vshrl.u32 %v964, 7
    %v966 = vsub.s32 3, %v965
    %v967 = vrot.slane %v950, %v966
    %v972 = vadd.f32 %v946, %v955
    %v973 = vadd.f32 %v947, %v959
    %v974 = vadd.f32 %v948, %v963
    %v975 = vadd.f32 %v949, %v967
    %vm976 = vcmp.gt.f32.partialorder %v972, 0.0
    %vm977 = vcmp.gt.f32.partialorder %v973, 0.0
    %vm978 = vcmp.gt.f32.partialorder %v974, 0.0
    %vm979 = vcmp.gt.f32.partialorder %v975, 0.0
    %v980 = vmul.f32 %v972, 0.2
    %v981 = vmul.f32 %v973, 0.2
    %v982 = vmul.f32 %v974, 0.2
    %v983 = vmul.f32 %v975, 0.2
    %v984 = vsel %vm976, %v972, %v980
    %v985 = vsel %vm977, %v973, %v981
    %v986 = vsel %vm978, %v974, %v982
    %v987 = vsel %vm979, %v975, %v983
    %v988 = vld [vmem:[%s8] sm:$0xff]
    %v989 = vld [vmem:[%s8 + $0x8] sm:$0xff]
    %v990 = vld [vmem:[%s8 + $0x10] sm:$0xff]
    %v991 = vld [vmem:[%s8 + $0x18] sm:$0xff]
    %v992 = vld [vmem:[%s8 + $0x20] sm:$0xff]
    %v993 = vld [vmem:[%s8 + $0x28] sm:$0xff]
    %v994 = vld [vmem:[%s8 + $0x30] sm:$0xff]
    %v995 = vld [vmem:[%s8 + $0x38] sm:$0xff]
    %v996 = vld [vmem:[%s8 + $0x40] sm:$0xff]
    %v997 = vld [vmem:[%s8 + $0x48] sm:$0xff]
    %v998 = vld [vmem:[%s8 + $0x50] sm:$0xff]
    %v999 = vld [vmem:[%s8 + $0x58] sm:$0xff]
    %v1000 = vld [vmem:[%s8 + $0x60] sm:$0xff]
    %v1001 = vld [vmem:[%s8 + $0x68] sm:$0xff]
    %v1002 = vld [vmem:[%s8 + $0x70] sm:$0xff]
    %v1003 = vld [vmem:[%s8 + $0x78] sm:$0xff]
    %v1004 = vld [vmem:[%s8 + $0x80] sm:$0xff]
    %v1005 = vld [vmem:[%s8 + $0x88] sm:$0xff]
    %v1006 = vld [vmem:[%s8 + $0x90] sm:$0xff]
    %v1007 = vld [vmem:[%s8 + $0x98] sm:$0xff]
    %v1008 = vld [vmem:[%s8 + $0xa0] sm:$0xff]
    %v1009 = vld [vmem:[%s8 + $0xa8] sm:$0xff]
    %v1010 = vld [vmem:[%s8 + $0xb0] sm:$0xff]
    %v1011 = vld [vmem:[%s8 + $0xb8] sm:$0xff]
    %v1012 = vld [vmem:[%s8 + $0xc0] sm:$0xff]
    %v1013 = vld [vmem:[%s8 + $0xc8] sm:$0xff]
    %v1014 = vld [vmem:[%s8 + $0xd0] sm:$0xff]
    %v1015 = vld [vmem:[%s8 + $0xd8] sm:$0xff]
    %v1016 = vld [vmem:[%s8 + $0xe0] sm:$0xff]
    %v1017 = vld [vmem:[%s8 + $0xe8] sm:$0xff]
    %v1018 = vld [vmem:[%s8 + $0xf0] sm:$0xff]
    %v1019 = vld [vmem:[%s8 + $0xf8] sm:$0xff]
    %v1020 = vld [vmem:[%s8 + $0x100] sm:$0xff]
    %v1021 = vld [vmem:[%s8 + $0x108] sm:$0xff]
    %v1022 = vld [vmem:[%s8 + $0x110] sm:$0xff]
    %v1023 = vld [vmem:[%s8 + $0x118] sm:$0xff]
    %v1024 = vld [vmem:[%s8 + $0x120] sm:$0xff]
    %v1025 = vld [vmem:[%s8 + $0x128] sm:$0xff]
    %v1026 = vld [vmem:[%s8 + $0x130] sm:$0xff]
    %v1027 = vld [vmem:[%s8 + $0x138] sm:$0xff]
    %v1028 = vld [vmem:[%s8 + $0x140] sm:$0xff]
    %v1029 = vld [vmem:[%s8 + $0x148] sm:$0xff]
    %v1030 = vld [vmem:[%s8 + $0x150] sm:$0xff]
    %v1031 = vld [vmem:[%s8 + $0x158] sm:$0xff]
    %v1032 = vld [vmem:[%s8 + $0x160] sm:$0xff]
    %v1033 = vld [vmem:[%s8 + $0x168] sm:$0xff]
    %v1034 = vld [vmem:[%s8 + $0x170] sm:$0xff]
    %v1035 = vld [vmem:[%s8 + $0x178] sm:$0xff]
    %v1036 = vld [vmem:[%s8 + $0x180] sm:$0xff]
    %v1037 = vld [vmem:[%s8 + $0x188] sm:$0xff]
    %v1038 = vld [vmem:[%s8 + $0x190] sm:$0xff]
    %v1039 = vld [vmem:[%s8 + $0x198] sm:$0xff]
    %v1040 = vld [vmem:[%s8 + $0x1a0] sm:$0xff]
    %v1041 = vld [vmem:[%s8 + $0x1a8] sm:$0xff]
    %v1042 = vld [vmem:[%s8 + $0x1b0] sm:$0xff]
    %v1043 = vld [vmem:[%s8 + $0x1b8] sm:$0xff]
    %v1044 = vld [vmem:[%s8 + $0x1c0] sm:$0xff]
    %v1045 = vld [vmem:[%s8 + $0x1c8] sm:$0xff]
    %v1046 = vld [vmem:[%s8 + $0x1d0] sm:$0xff]
    %v1047 = vld [vmem:[%s8 + $0x1d8] sm:$0xff]
    %v1048 = vld [vmem:[%s8 + $0x1e0] sm:$0xff]
    %v1049 = vld [vmem:[%s8 + $0x1e8] sm:$0xff]
    %v1050 = vld [vmem:[%s8 + $0x1f0] sm:$0xff]
    %v1051 = vld [vmem:[%s8 + $0x1f8] sm:$0xff]
    %v1052 = vld [vmem:[%s9] sm:$0x1]
    %v1054 = vlaneseq
    %v1055 = vshrl.u32 %v1054, 7
    %v1056 = vsub.s32 0, %v1055
    %v1057 = vrot.slane %v1052, %v1056
    %1059 = vmatprep.subr.mxu0 0.0
    %1060 = vmatpush1.msra.mxu0 %v988
    %1061 = vmatprep.subr.mxu0 0.0
    %1062 = vmatpush1.msra.mxu0 %v989
    %1063 = vmatprep.subr.mxu0 0.0
    %1064 = vmatpush1.msra.mxu0 %v990
    %1065 = vmatprep.subr.mxu0 0.0
    %1066 = vmatpush1.msra.mxu0 %v991
    %1067 = vmatprep.subr.mxu0 0.0
    %1068 = vmatpush1.msra.mxu0 %v992
    %1069 = vmatprep.subr.mxu0 0.0
    %1070 = vmatpush1.msra.mxu0 %v993
    %1071 = vmatprep.subr.mxu0 0.0
    %1072 = vmatpush1.msra.mxu0 %v994
    %1073 = vmatprep.subr.mxu0 0.0
    %1074 = vmatpush1.msra.mxu0 %v995
    %1075 = vmatprep.subr.mxu0 0.0
    %1076 = vmatpush1.msra.mxu0 %v996
    %1077 = vmatprep.subr.mxu0 0.0
    %1078 = vmatpush1.msra.mxu0 %v997
    %1079 = vmatprep.subr.mxu0 0.0
    %1080 = vmatpush1.msra.mxu0 %v998
    %1081 = vmatprep.subr.mxu0 0.0
    %1082 = vmatpush1.msra.mxu0 %v999
    %1083 = vmatprep.subr.mxu0 0.0
    %1084 = vmatpush1.msra.mxu0 %v1000
    %1085 = vmatprep.subr.mxu0 0.0
    %1086 = vmatpush1.msra.mxu0 %v1001
    %1087 = vmatprep.subr.mxu0 0.0
    %1088 = vmatpush1.msra.mxu0 %v1002
    %1089 = vmatprep.subr.mxu0 0.0
    %1090 = vmatpush1.msra.mxu0 %v1003
    %1091 = vmatprep.subr.mxu0 0.0
    %1092 = vmatpush1.msra.mxu0 %v1004
    %1093 = vmatprep.subr.mxu0 0.0
    %1094 = vmatpush1.msra.mxu0 %v1005
    %1095 = vmatprep.subr.mxu0 0.0
    %1096 = vmatpush1.msra.mxu0 %v1006
    %1097 = vmatprep.subr.mxu0 0.0
    %1098 = vmatpush1.msra.mxu0 %v1007
    %1099 = vmatprep.subr.mxu0 0.0
    %1100 = vmatpush1.msra.mxu0 %v1008
    %1101 = vmatprep.subr.mxu0 0.0
    %1102 = vmatpush1.msra.mxu0 %v1009
    %1103 = vmatprep.subr.mxu0 0.0
    %1104 = vmatpush1.msra.mxu0 %v1010
    %1105 = vmatprep.subr.mxu0 0.0
    %1106 = vmatpush1.msra.mxu0 %v1011
    %1107 = vmatprep.subr.mxu0 0.0
    %1108 = vmatpush1.msra.mxu0 %v1012
    %1109 = vmatprep.subr.mxu0 0.0
    %1110 = vmatpush1.msra.mxu0 %v1013
    %1111 = vmatprep.subr.mxu0 0.0
    %1112 = vmatpush1.msra.mxu0 %v1014
    %1113 = vmatprep.subr.mxu0 0.0
    %1114 = vmatpush1.msra.mxu0 %v1015
    %1115 = vmatprep.subr.mxu0 0.0
    %1116 = vmatpush1.msra.mxu0 %v1016
    %1117 = vmatprep.subr.mxu0 0.0
    %1118 = vmatpush1.msra.mxu0 %v1017
    %1119 = vmatprep.subr.mxu0 0.0
    %1120 = vmatpush1.msra.mxu0 %v1018
    %1121 = vmatprep.subr.mxu0 0.0
    %1122 = vmatpush1.msra.mxu0 %v1019
    %1123 = vmatprep.mubr.f32.mxu0 %v985
    %1124 = vmatmul.mubr.f32.gmra.mrb[0].mxu0 %v984
    %v1125 = vpop.f32.mrb[0].mxu0
    %v1126 = vadd.f32 %v1057, %v1125
    %v1127 = vpop.f32.mrb[0].mxu0
    %1128 = vdwg.mxu0
    %1129 = vmatprep.subr.mxu0 0.0
    %1130 = vmatpush1.msra.mxu0 %v1020
    %1131 = vmatprep.subr.mxu0 0.0
    %1132 = vmatpush1.msra.mxu0 %v1021
    %1133 = vmatprep.subr.mxu0 0.0
    %1134 = vmatpush1.msra.mxu0 %v1022
    %1135 = vmatprep.subr.mxu0 0.0
    %1136 = vmatpush1.msra.mxu0 %v1023
    %1137 = vmatprep.subr.mxu0 0.0
    %1138 = vmatpush1.msra.mxu0 %v1024
    %1139 = vmatprep.subr.mxu0 0.0
    %1140 = vmatpush1.msra.mxu0 %v1025
    %1141 = vmatprep.subr.mxu0 0.0
    %1142 = vmatpush1.msra.mxu0 %v1026
    %1143 = vmatprep.subr.mxu0 0.0
    %1144 = vmatpush1.msra.mxu0 %v1027
    %1145 = vmatprep.subr.mxu0 0.0
    %1146 = vmatpush1.msra.mxu0 %v1028
    %1147 = vmatprep.subr.mxu0 0.0
    %1148 = vmatpush1.msra.mxu0 %v1029
    %1149 = vmatprep.subr.mxu0 0.0
    %1150 = vmatpush1.msra.mxu0 %v1030
    %1151 = vmatprep.subr.mxu0 0.0
    %1152 = vmatpush1.msra.mxu0 %v1031
    %1153 = vmatprep.subr.mxu0 0.0
    %1154 = vmatpush1.msra.mxu0 %v1032
    %1155 = vmatprep.subr.mxu0 0.0
    %1156 = vmatpush1.msra.mxu0 %v1033
    %1157 = vmatprep.subr.mxu0 0.0
    %1158 = vmatpush1.msra.mxu0 %v1034
    %1159 = vmatprep.subr.mxu0 0.0
    %1160 = vmatpush1.msra.mxu0 %v1035
    %1161 = vmatprep.subr.mxu0 0.0
    %1162 = vmatpush1.msra.mxu0 %v1036
    %1163 = vmatprep.subr.mxu0 0.0
    %1164 = vmatpush1.msra.mxu0 %v1037
    %1165 = vmatprep.subr.mxu0 0.0
    %1166 = vmatpush1.msra.mxu0 %v1038
    %1167 = vmatprep.subr.mxu0 0.0
    %1168 = vmatpush1.msra.mxu0 %v1039
    %1169 = vmatprep.subr.mxu0 0.0
    %1170 = vmatpush1.msra.mxu0 %v1040
    %1171 = vmatprep.subr.mxu0 0.0
    %1172 = vmatpush1.msra.mxu0 %v1041
    %1173 = vmatprep.subr.mxu0 0.0
    %1174 = vmatpush1.msra.mxu0 %v1042
    %1175 = vmatprep.subr.mxu0 0.0
    %1176 = vmatpush1.msra.mxu0 %v1043
    %1177 = vmatprep.subr.mxu0 0.0
    %1178 = vmatpush1.msra.mxu0 %v1044
    %1179 = vmatprep.subr.mxu0 0.0
    %1180 = vmatpush1.msra.mxu0 %v1045
    %1181 = vmatprep.subr.mxu0 0.0
    %1182 = vmatpush1.msra.mxu0 %v1046
    %1183 = vmatprep.subr.mxu0 0.0
    %1184 = vmatpush1.msra.mxu0 %v1047
    %1185 = vmatprep.subr.mxu0 0.0
    %1186 = vmatpush1.msra.mxu0 %v1048
    %1187 = vmatprep.subr.mxu0 0.0
    %1188 = vmatpush1.msra.mxu0 %v1049
    %1189 = vmatprep.subr.mxu0 0.0
    %1190 = vmatpush1.msra.mxu0 %v1050
    %1191 = vmatprep.subr.mxu0 0.0
    %1192 = vmatpush1.msra.mxu0 %v1051
    %1193 = vmatprep.mubr.f32.mxu0 %v987
    %1194 = vmatmul.mubr.f32.gmra.mrb[0].mxu0 %v986
    %v1195 = vpop.f32.mrb[0].mxu0
    %v1196 = vadd.f32 %v1126, %v1195
    %v1197 = vpop.f32.mrb[0].mxu0
    %1198 = vdwg.mxu0
    %v1199 = vld [vmem:[%s10] sm:$0xff]
    %v1200 = vld [vmem:[%s10 + $0x8] sm:$0xff]
    %v1201 = vld [vmem:[%s10 + $0x10] sm:$0xff]
    %v1202 = vld [vmem:[%s10 + $0x18] sm:$0xff]
    %v1203 = vld [vmem:[%s10 + $0x20] sm:$0xff]
    %v1204 = vld [vmem:[%s10 + $0x28] sm:$0xff]
    %v1205 = vld [vmem:[%s10 + $0x30] sm:$0xff]
    %v1206 = vld [vmem:[%s10 + $0x38] sm:$0xff]
    %v1207 = vld [vmem:[%s10 + $0x40] sm:$0xff]
    %v1208 = vld [vmem:[%s10 + $0x48] sm:$0xff]
    %v1209 = vld [vmem:[%s10 + $0x50] sm:$0xff]
    %v1210 = vld [vmem:[%s10 + $0x58] sm:$0xff]
    %v1211 = vld [vmem:[%s10 + $0x60] sm:$0xff]
    %v1212 = vld [vmem:[%s10 + $0x68] sm:$0xff]
    %v1213 = vld [vmem:[%s10 + $0x70] sm:$0xff]
    %v1214 = vld [vmem:[%s10 + $0x78] sm:$0xff]
    %v1215 = vld [vmem:[%s10 + $0x80] sm:$0xff]
    %v1216 = vld [vmem:[%s10 + $0x88] sm:$0xff]
    %v1217 = vld [vmem:[%s10 + $0x90] sm:$0xff]
    %v1218 = vld [vmem:[%s10 + $0x98] sm:$0xff]
    %v1219 = vld [vmem:[%s10 + $0xa0] sm:$0xff]
    %v1220 = vld [vmem:[%s10 + $0xa8] sm:$0xff]
    %v1221 = vld [vmem:[%s10 + $0xb0] sm:$0xff]
    %v1222 = vld [vmem:[%s10 + $0xb8] sm:$0xff]
    %v1223 = vld [vmem:[%s10 + $0xc0] sm:$0xff]
    %v1224 = vld [vmem:[%s10 + $0xc8] sm:$0xff]
    %v1225 = vld [vmem:[%s10 + $0xd0] sm:$0xff]
    %v1226 = vld [vmem:[%s10 + $0xd8] sm:$0xff]
    %v1227 = vld [vmem:[%s10 + $0xe0] sm:$0xff]
    %v1228 = vld [vmem:[%s10 + $0xe8] sm:$0xff]
    %v1229 = vld [vmem:[%s10 + $0xf0] sm:$0xff]
    %v1230 = vld [vmem:[%s10 + $0xf8] sm:$0xff]
    %v1231 = vld [vmem:[%s10 + $0x100] sm:$0xff]
    %v1232 = vld [vmem:[%s10 + $0x108] sm:$0xff]
    %v1233 = vld [vmem:[%s10 + $0x110] sm:$0xff]
    %v1234 = vld [vmem:[%s10 + $0x118] sm:$0xff]
    %v1235 = vld [vmem:[%s10 + $0x120] sm:$0xff]
    %v1236 = vld [vmem:[%s10 + $0x128] sm:$0xff]
    %v1237 = vld [vmem:[%s10 + $0x130] sm:$0xff]
    %v1238 = vld [vmem:[%s10 + $0x138] sm:$0xff]
    %v1239 = vld [vmem:[%s10 + $0x140] sm:$0xff]
    %v1240 = vld [vmem:[%s10 + $0x148] sm:$0xff]
    %v1241 = vld [vmem:[%s10 + $0x150] sm:$0xff]
    %v1242 = vld [vmem:[%s10 + $0x158] sm:$0xff]
    %v1243 = vld [vmem:[%s10 + $0x160] sm:$0xff]
    %v1244 = vld [vmem:[%s10 + $0x168] sm:$0xff]
    %v1245 = vld [vmem:[%s10 + $0x170] sm:$0xff]
    %v1246 = vld [vmem:[%s10 + $0x178] sm:$0xff]
    %v1247 = vld [vmem:[%s10 + $0x180] sm:$0xff]
    %v1248 = vld [vmem:[%s10 + $0x188] sm:$0xff]
    %v1249 = vld [vmem:[%s10 + $0x190] sm:$0xff]
    %v1250 = vld [vmem:[%s10 + $0x198] sm:$0xff]
    %v1251 = vld [vmem:[%s10 + $0x1a0] sm:$0xff]
    %v1252 = vld [vmem:[%s10 + $0x1a8] sm:$0xff]
    %v1253 = vld [vmem:[%s10 + $0x1b0] sm:$0xff]
    %v1254 = vld [vmem:[%s10 + $0x1b8] sm:$0xff]
    %v1255 = vld [vmem:[%s10 + $0x1c0] sm:$0xff]
    %v1256 = vld [vmem:[%s10 + $0x1c8] sm:$0xff]
    %v1257 = vld [vmem:[%s10 + $0x1d0] sm:$0xff]
    %v1258 = vld [vmem:[%s10 + $0x1d8] sm:$0xff]
    %v1259 = vld [vmem:[%s10 + $0x1e0] sm:$0xff]
    %v1260 = vld [vmem:[%s10 + $0x1e8] sm:$0xff]
    %v1261 = vld [vmem:[%s10 + $0x1f0] sm:$0xff]
    %v1262 = vld [vmem:[%s10 + $0x1f8] sm:$0xff]
    %v1263 = vld [vmem:[%s11] sm:$0x1]
    %v1265 = vlaneseq
    %v1266 = vshrl.u32 %v1265, 7
    %v1267 = vsub.s32 0, %v1266
    %v1268 = vrot.slane %v1263, %v1267
    %1270 = vmatprep.subr.mxu0 0.0
    %1271 = vmatpush1.msra.mxu0 %v1199
    %1272 = vmatprep.subr.mxu0 0.0
    %1273 = vmatpush1.msra.mxu0 %v1200
    %1274 = vmatprep.subr.mxu0 0.0
    %1275 = vmatpush1.msra.mxu0 %v1201
    %1276 = vmatprep.subr.mxu0 0.0
    %1277 = vmatpush1.msra.mxu0 %v1202
    %1278 = vmatprep.subr.mxu0 0.0
    %1279 = vmatpush1.msra.mxu0 %v1203
    %1280 = vmatprep.subr.mxu0 0.0
    %1281 = vmatpush1.msra.mxu0 %v1204
    %1282 = vmatprep.subr.mxu0 0.0
    %1283 = vmatpush1.msra.mxu0 %v1205
    %1284 = vmatprep.subr.mxu0 0.0
    %1285 = vmatpush1.msra.mxu0 %v1206
    %1286 = vmatprep.subr.mxu0 0.0
    %1287 = vmatpush1.msra.mxu0 %v1207
    %1288 = vmatprep.subr.mxu0 0.0
    %1289 = vmatpush1.msra.mxu0 %v1208
    %1290 = vmatprep.subr.mxu0 0.0
    %1291 = vmatpush1.msra.mxu0 %v1209
    %1292 = vmatprep.subr.mxu0 0.0
    %1293 = vmatpush1.msra.mxu0 %v1210
    %1294 = vmatprep.subr.mxu0 0.0
    %1295 = vmatpush1.msra.mxu0 %v1211
    %1296 = vmatprep.subr.mxu0 0.0
    %1297 = vmatpush1.msra.mxu0 %v1212
    %1298 = vmatprep.subr.mxu0 0.0
    %1299 = vmatpush1.msra.mxu0 %v1213
    %1300 = vmatprep.subr.mxu0 0.0
    %1301 = vmatpush1.msra.mxu0 %v1214
    %1302 = vmatprep.subr.mxu0 0.0
    %1303 = vmatpush1.msra.mxu0 %v1215
    %1304 = vmatprep.subr.mxu0 0.0
    %1305 = vmatpush1.msra.mxu0 %v1216
    %1306 = vmatprep.subr.mxu0 0.0
    %1307 = vmatpush1.msra.mxu0 %v1217
    %1308 = vmatprep.subr.mxu0 0.0
    %1309 = vmatpush1.msra.mxu0 %v1218
    %1310 = vmatprep.subr.mxu0 0.0
    %1311 = vmatpush1.msra.mxu0 %v1219
    %1312 = vmatprep.subr.mxu0 0.0
    %1313 = vmatpush1.msra.mxu0 %v1220
    %1314 = vmatprep.subr.mxu0 0.0
    %1315 = vmatpush1.msra.mxu0 %v1221
    %1316 = vmatprep.subr.mxu0 0.0
    %1317 = vmatpush1.msra.mxu0 %v1222
    %1318 = vmatprep.subr.mxu0 0.0
    %1319 = vmatpush1.msra.mxu0 %v1223
    %1320 = vmatprep.subr.mxu0 0.0
    %1321 = vmatpush1.msra.mxu0 %v1224
    %1322 = vmatprep.subr.mxu0 0.0
    %1323 = vmatpush1.msra.mxu0 %v1225
    %1324 = vmatprep.subr.mxu0 0.0
    %1325 = vmatpush1.msra.mxu0 %v1226
    %1326 = vmatprep.subr.mxu0 0.0
    %1327 = vmatpush1.msra.mxu0 %v1227
    %1328 = vmatprep.subr.mxu0 0.0
    %1329 = vmatpush1.msra.mxu0 %v1228
    %1330 = vmatprep.subr.mxu0 0.0
    %1331 = vmatpush1.msra.mxu0 %v1229
    %1332 = vmatprep.subr.mxu0 0.0
    %1333 = vmatpush1.msra.mxu0 %v1230
    %1334 = vmatprep.mubr.f32.mxu0 %v985
    %1335 = vmatmul.mubr.f32.gmra.mrb[0].mxu0 %v984
    %v1336 = vpop.f32.mrb[0].mxu0
    %v1337 = vadd.f32 %v1268, %v1336
    %v1338 = vpop.f32.mrb[0].mxu0
    %1339 = vdwg.mxu0
    %1340 = vmatprep.subr.mxu0 0.0
    %1341 = vmatpush1.msra.mxu0 %v1231
    %1342 = vmatprep.subr.mxu0 0.0
    %1343 = vmatpush1.msra.mxu0 %v1232
    %1344 = vmatprep.subr.mxu0 0.0
    %1345 = vmatpush1.msra.mxu0 %v1233
    %1346 = vmatprep.subr.mxu0 0.0
    %1347 = vmatpush1.msra.mxu0 %v1234
    %1348 = vmatprep.subr.mxu0 0.0
    %1349 = vmatpush1.msra.mxu0 %v1235
    %1350 = vmatprep.subr.mxu0 0.0
    %1351 = vmatpush1.msra.mxu0 %v1236
    %1352 = vmatprep.subr.mxu0 0.0
    %1353 = vmatpush1.msra.mxu0 %v1237
    %1354 = vmatprep.subr.mxu0 0.0
    %1355 = vmatpush1.msra.mxu0 %v1238
    %1356 = vmatprep.subr.mxu0 0.0
    %1357 = vmatpush1.msra.mxu0 %v1239
    %1358 = vmatprep.subr.mxu0 0.0
    %1359 = vmatpush1.msra.mxu0 %v1240
    %1360 = vmatprep.subr.mxu0 0.0
    %1361 = vmatpush1.msra.mxu0 %v1241
    %1362 = vmatprep.subr.mxu0 0.0
    %1363 = vmatpush1.msra.mxu0 %v1242
    %1364 = vmatprep.subr.mxu0 0.0
    %1365 = vmatpush1.msra.mxu0 %v1243
    %1366 = vmatprep.subr.mxu0 0.0
    %1367 = vmatpush1.msra.mxu0 %v1244
    %1368 = vmatprep.subr.mxu0 0.0
    %1369 = vmatpush1.msra.mxu0 %v1245
    %1370 = vmatprep.subr.mxu0 0.0
    %1371 = vmatpush1.msra.mxu0 %v1246
    %1372 = vmatprep.subr.mxu0 0.0
    %1373 = vmatpush1.msra.mxu0 %v1247
    %1374 = vmatprep.subr.mxu0 0.0
    %1375 = vmatpush1.msra.mxu0 %v1248
    %1376 = vmatprep.subr.mxu0 0.0
    %1377 = vmatpush1.msra.mxu0 %v1249
    %1378 = vmatprep.subr.mxu0 0.0
    %1379 = vmatpush1.msra.mxu0 %v1250
    %1380 = vmatprep.subr.mxu0 0.0
    %1381 = vmatpush1.msra.mxu0 %v1251
    %1382 = vmatprep.subr.mxu0 0.0
    %1383 = vmatpush1.msra.mxu0 %v1252
    %1384 = vmatprep.subr.mxu0 0.0
    %1385 = vmatpush1.msra.mxu0 %v1253
    %1386 = vmatprep.subr.mxu0 0.0
    %1387 = vmatpush1.msra.mxu0 %v1254
    %1388 = vmatprep.subr.mxu0 0.0
    %1389 = vmatpush1.msra.mxu0 %v1255
    %1390 = vmatprep.subr.mxu0 0.0
    %1391 = vmatpush1.msra.mxu0 %v1256
    %1392 = vmatprep.subr.mxu0 0.0
    %1393 = vmatpush1.msra.mxu0 %v1257
    %1394 = vmatprep.subr.mxu0 0.0
    %1395 = vmatpush1.msra.mxu0 %v1258
    %1396 = vmatprep.subr.mxu0 0.0
    %1397 = vmatpush1.msra.mxu0 %v1259
    %1398 = vmatprep.subr.mxu0 0.0
    %1399 = vmatpush1.msra.mxu0 %v1260
    %1400 = vmatprep.subr.mxu0 0.0
    %1401 = vmatpush1.msra.mxu0 %v1261
    %1402 = vmatprep.subr.mxu0 0.0
    %1403 = vmatpush1.msra.mxu0 %v1262
    %1404 = vmatprep.mubr.f32.mxu0 %v987
    %1405 = vmatmul.mubr.f32.gmra.mrb[0].mxu0 %v986
    %v1406 = vpop.f32.mrb[0].mxu0
    %v1407 = vadd.f32 %v1337, %v1406
    %v1408 = vpop.f32.mrb[0].mxu0
    %1409 = vdwg.mxu0
    %v1410 = vmul.f32 %v1407, 0.5
    %v1411 = vmul.f32 %v1410, 1.442695
    %v1412 = vpow.pop %v1411
    %v1413 = vld [vmem:[%s1] sm:$0xff]
    %v1414 = vmul.f32 %v1413, %v1412
    %v1415 = vadd.f32 %v1414, %v1196
    %vm1416 = vcmask 261120
    %1417 = vst.msk [vmem:[#allocation5] sm:$0xff] %vm1416, %v1415
    // Predicated region
    $region54: #{tpu_custom_call.1} parent=1 // pred_check
      _
    $region55: #{tpu_custom_call.1} parent=1 // pred_check_branch
      %1419 = sbr.rel (0) target = $region57
    $region56: #{tpu_custom_call.1} parent=1 // pred_region
      %s1421 = ssub.s32 128, 128
      %1422 = vsyncadd [#allocation4], %s1421
      %s1424 = sshll.u32 [#allocation5], 4
      %s1425 = int_to_ptr.vmem [resolvable:$true] %s1424
      %1427 = dma.vmem_to_hbm [thread:$0]  %s1425, 128, %s12, [#allocation4]
    $region57: #{tpu_custom_call.1} parent=1 // pred_fallthru
      _
    // Predicated region
    $region58: #{tpu_custom_call.1} parent=1 // pred_check
      _
    $region59: #{tpu_custom_call.1} parent=1 // pred_check_branch
      %1429 = sbr.rel (0) target = $region61
    $region60: #{tpu_custom_call.1} parent=1 // pred_region
      %1430 = dma.done [#allocation4], 128
    $region61: #{tpu_custom_call.1} parent=1 // pred_fallthru
      _
    %1431 = vsyncpa [#allocation3], 1
    %1432 = vsyncpa [#allocation4], 1

</llo_original>
